<compile_context>
chip_gen: v7x
topology: tpu7x:2x2x1
jax: 0.10.0
libtpu: 0.0.40
codegen_flags: <defaults>
</compile_context>

<pallas_src>
import functools
import math

import numpy as np
import jax
import jax.numpy as jnp
from jax.experimental import pallas as pl
from jax.experimental.pallas import tpu as pltpu

EPS = 1e-5


def _encoder_kernel(x_ref, w1_ref, b1_ref, w2_ref, b2_ref, w3_ref, b3_ref,
                    ps_ref, pb_ref, wqkv_ref, wo_ref, o_ref, *, n_heads):
    B, D, L = x_ref.shape
    L2 = L // 2
    BL = B * L

    # (B, D, L) -> (B*L, D): one in-VMEM relayout instead of a wrapper-side XLA
    # transpose.  Channels on lanes, (batch, length) rows on sublanes.
    x = jnp.swapaxes(x_ref[...], 1, 2).reshape(BL, D)

    # Per-row masks marking the first / last row of every length-L segment.
    row = jax.lax.broadcasted_iota(jnp.int32, (BL, 1), 0)
    first = (row % L) == 0
    last = (row % L) == (L - 1)

    def conv3(h, w_ref, b_ref):
        # Conv1d(kernel=3, stride=1, pad=1) with BN folded, as a single im2col
        # matmul.  Shifts use pltpu.roll (XLU) + zeroed boundary rows (= zero
        # padding); stacked weight rows are ordered [prev, center, next].
        h_prev = jnp.where(first, 0.0, pltpu.roll(h, shift=1, axis=0))
        h_next = jnp.where(last, 0.0, pltpu.roll(h, shift=BL - 1, axis=0))
        col = jnp.concatenate([h_prev, h, h_next], axis=-1)       # (BL, 3*Cin)
        return (jnp.dot(col, w_ref[...], preferred_element_type=jnp.float32)
                + b_ref[...])

    # IbnBlock stream: conv-bn-relu x2, conv-bn, residual.
    h = jnp.maximum(conv3(x, w1_ref, b1_ref), 0.0)
    h = jnp.maximum(conv3(h, w2_ref, b2_ref), 0.0)
    h = conv3(h, w3_ref, b3_ref)
    y = x + h                                                     # (BL, D)

    # InstanceNorm1d (affine=False): per (batch, channel) normalization over L,
    # then ReLU.
    y3 = y.reshape(B, L, D)
    mu = jnp.mean(y3, axis=1, keepdims=True)
    var = jnp.mean((y3 - mu) ** 2, axis=1, keepdims=True)
    y = jnp.maximum((y3 - mu) * jax.lax.rsqrt(var + EPS), 0.0).reshape(BL, D)

    # max_pool1d(kernel_size=2): one XLU roll pairs row i with row i+1, then a
    # single even-row compaction (instead of two stride-2 sublane slices).
    m = jnp.maximum(y, pltpu.roll(y, shift=BL - 1, axis=0))
    z = m.reshape(B * L2, 2, D)[:, 0, :]                          # (B*L2, D)

    # eval-mode BatchNorm1d (self.norm) folded into a per-channel affine.
    z = z * ps_ref[...] + pb_ref[...]

    # Multi-head self-attention, q = k = v = z; wq/wk/wv fused into one matmul.
    qkv = jnp.dot(z, wqkv_ref[...], preferred_element_type=jnp.float32)  # (B*L2, 3D)
    qkv3 = qkv.reshape(B, L2, 3 * D)
    dh = D // n_heads
    inv_scale = 1.0 / math.sqrt(D)     # module scales by d_model**0.5 (not d_head)

    # TODO(synk): a reshape->(B,L2,H,dh) + two-batch-dim einsum would avoid the
    # per-head lane slices, but needs a non-minor-dim transpose; the concat-to-
    # leading-axis form below is the proven-lowerable one and the attention
    # epilogue is tiny at D=32.
    def split_heads(base):
        # Head slices stacked along the leading (batch) axis: (n_heads*B, L2, dh).
        return jnp.concatenate(
            [qkv3[:, :, base + h0 * dh: base + (h0 + 1) * dh]
             for h0 in range(n_heads)], axis=0)

    qs, ks, vs = split_heads(0), split_heads(D), split_heads(2 * D)
    s = jnp.einsum('bqd,bkd->bqk', qs, ks,
                   preferred_element_type=jnp.float32) * inv_scale
    s = s - jnp.max(s, axis=-1, keepdims=True)
    p = jnp.exp(s)
    # TODO(synk): pl.reciprocal(approx=True) (EUP) is borderline vs the 2e-4
    # parity tolerance; kept exact.
    p = p * pl.reciprocal(jnp.sum(p, axis=-1, keepdims=True))
    o = jnp.einsum('bqk,bkd->bqd', p, vs,
                   preferred_element_type=jnp.float32)            # (H*B, L2, dh)
    attn = jnp.concatenate([o[h0 * B:(h0 + 1) * B] for h0 in range(n_heads)],
                           axis=-1)                               # (B, L2, D)
    attn = jnp.dot(attn.reshape(B * L2, D), wo_ref[...],
                   preferred_element_type=jnp.float32)

    # Dropout is the identity (eval mode).  Store in the caller's (B, D, L2)
    # layout: lane-dense stores for realistic L and no wrapper output transpose.
    out = (z + attn).reshape(B, L2, D)
    o_ref[...] = jnp.swapaxes(out, 1, 2)


def _pick_batch_block(n, d, l):
    """Batch elements per grid step: target ~1 MiB input slabs (>=85% of the HBM
    roofline per measured tile sweeps) to amortize the ~0.35us/step pipeline
    overhead, but keep >=2 grid steps when N permits so the 'parallel' grid axis
    shards across v7x's two TensorCores."""
    target_b = max(1, (1 << 20) // (4 * d * max(l, 1)))
    divisors = [b for b in range(1, n + 1) if n % b == 0]
    fits = [b for b in divisors if b <= target_b] or [1]
    multi = [b for b in fits if n // b >= 2]
    return max(multi or fits)


def _vmem_limit_bytes(b, d, m, l, n_heads):
    """Scoped-VMEM budget: double-buffered I/O slabs + live f32 intermediates
    (im2col columns, qkv, per-head scores) with 2x headroom; capped below the
    v7x 64 MiB physical VMEM."""
    l2 = max(l // 2, 1)
    f = 4
    io = 2 * (b * d * l + b * d * l2) * f                  # double-buffered slabs
    work = b * l * (2 * d + 3 * max(d, m) + 2 * m) * f     # conv stream live set
    attn = b * l2 * 6 * d * f + 2 * n_heads * b * l2 * l2 * f
    weights = (9 * max(d, m) ** 2 + 4 * d * d + 8 * d) * f
    est = io + 2 * (work + attn) + 2 * weights + (1 << 20)
    return int(min(max(est, 32 << 20), 48 << 20))


def example_encoder_layer(x_ncl, kp, n_heads):
    """x_ncl: (N, D, L) float32 -> (N, D, L//2) float32, no wrapper transposes."""
    N, D, L = x_ncl.shape
    L2 = L // 2
    M = kp['w1f'].shape[1]
    B = _pick_batch_block(N, D, L)
    grid = (N // B,)

    weights = [kp['w1f'], kp['b1f'], kp['w2f'], kp['b2f'], kp['w3f'], kp['b3f'],
               kp['ps'], kp['pb'], kp['wqkv'], kp['wo']]
    in_specs = ([pl.BlockSpec((B, D, L), lambda n: (n, 0, 0))] +
                [pl.BlockSpec(w.shape, lambda n: (0, 0)) for w in weights])

    out = pl.pallas_call(
        functools.partial(_encoder_kernel, n_heads=n_heads),
        out_shape=jax.ShapeDtypeStruct((N, D, L2), jnp.float32),
        grid=grid,
        in_specs=in_specs,
        out_specs=pl.BlockSpec((B, D, L2), lambda n: (n, 0, 0)),
        compiler_params=pltpu.CompilerParams(
            dimension_semantics=("parallel",),
            vmem_limit_bytes=_vmem_limit_bytes(B, D, M, L, n_heads)),
    )(x_ncl.astype(jnp.float32), *weights)
    return out                                                    # (N, D, L//2)


def init_params(key, inplates, midplates, n_heads):
    """Deterministic synthetic parameters. Returns (raw torch-layout params,
    kernel params: BN folded, conv weights im2col-stacked, wq/wk/wv fused)."""
    D, M = inplates, midplates
    keys = iter(jax.random.split(key, 32))

    def nrm(shape, scale=0.1):
        return scale * jax.random.normal(next(keys), shape, dtype=jnp.float32)

    def bn(c):
        g = 1.0 + nrm((c,))
        be = nrm((c,))
        m = nrm((c,))
        v = jax.random.uniform(next(keys), (c,), jnp.float32, 0.5, 1.5)
        return g, be, m, v

    raw = {}
    raw['w1'], raw['cb1'] = nrm((M, D, 3)), nrm((M,))
    raw['w2'], raw['cb2'] = nrm((M, M, 3)), nrm((M,))
    raw['w3'], raw['cb3'] = nrm((D, M, 3)), nrm((D,))
    raw['g1'], raw['be1'], raw['m1'], raw['v1'] = bn(M)
    raw['g2'], raw['be2'], raw['m2'], raw['v2'] = bn(M)
    raw['g3'], raw['be3'], raw['m3'], raw['v3'] = bn(D)
    raw['pg'], raw['pbeta'], raw['pm'], raw['pv'] = bn(D)
    raw['wq'], raw['wk'] = nrm((D, D)), nrm((D, D))
    raw['wv'], raw['wo'] = nrm((D, D)), nrm((D, D))

    def fold(w, cb, g, be, m, v):
        # torch conv weight (Cout, Cin, 3) -> stacked (3*Cin, Cout) with BN folded;
        # row blocks ordered [k=0 (prev), k=1 (center), k=2 (next)].
        cout, cin, _ = w.shape
        scale = g / jnp.sqrt(v + EPS)                                  # (Cout,)
        w_t = jnp.transpose(w, (2, 1, 0)) * scale[None, None, :]       # (3, Cin, Cout)
        w_stk = w_t.reshape(3 * cin, cout)
        b_f = ((cb - m) * scale + be)[None, :]
        return w_stk, b_f

    kp = {}
    kp['w1f'], kp['b1f'] = fold(raw['w1'], raw['cb1'], raw['g1'], raw['be1'], raw['m1'], raw['v1'])
    kp['w2f'], kp['b2f'] = fold(raw['w2'], raw['cb2'], raw['g2'], raw['be2'], raw['m2'], raw['v2'])
    kp['w3f'], kp['b3f'] = fold(raw['w3'], raw['cb3'], raw['g3'], raw['be3'], raw['m3'], raw['v3'])
    ps = raw['pg'] / jnp.sqrt(raw['pv'] + EPS)
    kp['ps'] = ps[None, :]
    kp['pb'] = (raw['pbeta'] - raw['pm'] * ps)[None, :]
    kp['wqkv'] = jnp.concatenate([raw['wq'], raw['wk'], raw['wv']], axis=1)  # (D, 3D)
    kp['wo'] = raw['wo']
    return raw, kp


def reference_forward(x_ncl, P, n_heads):
    """Pure-JAX reference matching the PyTorch forward (eval mode)."""
    hi = jax.lax.Precision.HIGHEST

    def conv_bn(x, w, b, g, be, m, v):
        y = jax.lax.conv_general_dilated(
            x, w, window_strides=(1,), padding=((1, 1),),
            dimension_numbers=('NCH', 'OIH', 'NCH'), precision=hi)
        y = y + b[None, :, None]
        return ((y - m[None, :, None]) / jnp.sqrt(v[None, :, None] + EPS)
                * g[None, :, None] + be[None, :, None])

    h = jax.nn.relu(conv_bn(x_ncl, P['w1'], P['cb1'], P['g1'], P['be1'], P['m1'], P['v1']))
    h = jax.nn.relu(conv_bn(h, P['w2'], P['cb2'], P['g2'], P['be2'], P['m2'], P['v2']))
    h = conv_bn(h, P['w3'], P['cb3'], P['g3'], P['be3'], P['m3'], P['v3'])
    y = x_ncl + h
    mu = jnp.mean(y, axis=2, keepdims=True)
    var = jnp.mean((y - mu) ** 2, axis=2, keepdims=True)
    y = jax.nn.relu((y - mu) / jnp.sqrt(var + EPS))
    N, C, L = y.shape
    y = jnp.max(y.reshape(N, C, L // 2, 2), axis=-1)
    y = ((y - P['pm'][None, :, None]) / jnp.sqrt(P['pv'][None, :, None] + EPS)
         * P['pg'][None, :, None] + P['pbeta'][None, :, None])
    z = jnp.transpose(y, (0, 2, 1))                                  # (N, L2, D)
    q = jnp.dot(z, P['wq'], precision=hi)
    k = jnp.dot(z, P['wk'], precision=hi)
    v = jnp.dot(z, P['wv'], precision=hi)
    Nn, L2, D = z.shape
    dh = D // n_heads
    q4 = q.reshape(Nn, L2, n_heads, dh)
    k4 = k.reshape(Nn, L2, n_heads, dh)
    v4 = v.reshape(Nn, L2, n_heads, dh)
    s = jnp.einsum('nqhd,nkhd->nhqk', q4, k4, precision=hi) / math.sqrt(D)
    p = jax.nn.softmax(s, axis=-1)
    o = jnp.einsum('nhqk,nkhd->nqhd', p, v4, precision=hi).reshape(Nn, L2, D)
    o = jnp.dot(o, P['wo'], precision=hi)
    return jnp.transpose(z + o, (0, 2, 1))


if __name__ == "__main__":
    N, inplates, midplates, L, n_heads = 2, 32, 16, 16, 4
    key = jax.random.PRNGKey(0)
    kx, kparams = jax.random.split(key)
    x = jax.random.normal(kx, (N, inplates, L), dtype=jnp.float32)   # (N, D, L)

    raw, kern_params = init_params(kparams, inplates, midplates, n_heads)

    out = example_encoder_layer(x, kern_params, n_heads)
    out = jax.block_until_ready(out)                                 # (N, D, L//2)

    ref = reference_forward(x, raw, n_heads)
    np.testing.assert_allclose(np.asarray(out), np.asarray(ref),
                               rtol=2e-4, atol=2e-4)
    print("KERNEL_OK")
</pallas_src>

<mosaic_0001>
module attributes {stable_mosaic.version = 11 : i64} {
  func.func @_encoder_kernel(%arg0: i32, %arg1: memref<1x32x16xf32, #tpu.memory_space<vmem>>, %arg2: memref<96x16xf32, #tpu.memory_space<vmem>>, %arg3: memref<1x16xf32, #tpu.memory_space<vmem>>, %arg4: memref<48x16xf32, #tpu.memory_space<vmem>>, %arg5: memref<1x16xf32, #tpu.memory_space<vmem>>, %arg6: memref<48x32xf32, #tpu.memory_space<vmem>>, %arg7: memref<1x32xf32, #tpu.memory_space<vmem>>, %arg8: memref<1x32xf32, #tpu.memory_space<vmem>>, %arg9: memref<1x32xf32, #tpu.memory_space<vmem>>, %arg10: memref<32x96xf32, #tpu.memory_space<vmem>>, %arg11: memref<32x32xf32, #tpu.memory_space<vmem>>, %arg12: memref<1x32x8xf32, #tpu.memory_space<vmem>>) attributes {dimension_semantics = [#tpu.dimension_semantics<parallel>], iteration_bounds = array<i64: 2>, scalar_prefetch = 0 : i64, scratch_operands = 0 : i64, tpu.core_type = #tpu.core_type<tc>, window_params = [{transform_indices = @transform_0, window_bounds = array<i64: 1, 32, 16>}, {pipeline_mode = #tpu.pipeline_mode<synchronous>, transform_indices = @transform_1, window_bounds = array<i64: 96, 16>}, {pipeline_mode = #tpu.pipeline_mode<synchronous>, transform_indices = @transform_2, window_bounds = array<i64: 1, 16>}, {pipeline_mode = #tpu.pipeline_mode<synchronous>, transform_indices = @transform_3, window_bounds = array<i64: 48, 16>}, {pipeline_mode = #tpu.pipeline_mode<synchronous>, transform_indices = @transform_4, window_bounds = array<i64: 1, 16>}, {pipeline_mode = #tpu.pipeline_mode<synchronous>, transform_indices = @transform_5, window_bounds = array<i64: 48, 32>}, {pipeline_mode = #tpu.pipeline_mode<synchronous>, transform_indices = @transform_6, window_bounds = array<i64: 1, 32>}, {pipeline_mode = #tpu.pipeline_mode<synchronous>, transform_indices = @transform_7, window_bounds = array<i64: 1, 32>}, {pipeline_mode = #tpu.pipeline_mode<synchronous>, transform_indices = @transform_8, window_bounds = array<i64: 1, 32>}, {pipeline_mode = #tpu.pipeline_mode<synchronous>, transform_indices = @transform_9, window_bounds = array<i64: 32, 96>}, {pipeline_mode = #tpu.pipeline_mode<synchronous>, transform_indices = @transform_10, window_bounds = array<i64: 32, 32>}, {transform_indices = @transform_11, window_bounds = array<i64: 1, 32, 8>}]} {
    %c0 = arith.constant 0 : index
    %c0_0 = arith.constant 0 : index
    %c0_1 = arith.constant 0 : index
    %0 = vector.load %arg1[%c0, %c0_0, %c0_1] : memref<1x32x16xf32, #tpu.memory_space<vmem>>, vector<1x32x16xf32>
    %1 = tpu.transpose %0, [0, 2, 1] : vector<1x32x16xf32> -> vector<1x16x32xf32>
    %2 = vector.shape_cast %1 : vector<1x16x32xf32> to vector<16x32xf32>
    %3 = tpu.iota {dimensions = array<i32: 0>} : vector<16x1xi32>
    %c16_i32 = arith.constant 16 : i32
    %c0_i32 = arith.constant 0 : i32
    %4 = arith.cmpi eq, %c16_i32, %c0_i32 : i32
    %c1_i32 = arith.constant 1 : i32
    %5 = arith.select %4, %c1_i32, %c16_i32 : i32
    %6 = vector.broadcast %5 : i32 to vector<16x1xi32>
    %7 = arith.remsi %3, %6 : vector<16x1xi32>
    %c0_i32_2 = arith.constant 0 : i32
    %8 = vector.broadcast %c0_i32_2 : i32 to vector<16x1xi32>
    %9 = arith.cmpi ne, %7, %8 : vector<16x1xi32>
    %c0_i32_3 = arith.constant 0 : i32
    %10 = vector.broadcast %c0_i32_3 : i32 to vector<16x1xi32>
    %11 = arith.cmpi slt, %7, %10 : vector<16x1xi32>
    %c0_i32_4 = arith.constant 0 : i32
    %12 = arith.cmpi slt, %5, %c0_i32_4 : i32
    %13 = vector.broadcast %12 : i1 to vector<16x1xi1>
    %14 = vector.broadcast %13 : vector<16x1xi1> to vector<16x1xi1>
    %15 = arith.xori %11, %14 : vector<16x1xi1>
    %16 = arith.andi %15, %9 : vector<16x1xi1>
    %17 = vector.broadcast %5 : i32 to vector<16x1xi32>
    %18 = arith.addi %7, %17 : vector<16x1xi32>
    %19 = arith.select %16, %18, %7 : vector<16x1xi1>, vector<16x1xi32>
    %c0_i32_5 = arith.constant 0 : i32
    %20 = vector.broadcast %c0_i32_5 : i32 to vector<16x1xi32>
    %21 = arith.cmpi eq, %19, %20 : vector<16x1xi32>
    %c16_i32_6 = arith.constant 16 : i32
    %c0_i32_7 = arith.constant 0 : i32
    %22 = arith.cmpi eq, %c16_i32_6, %c0_i32_7 : i32
    %c1_i32_8 = arith.constant 1 : i32
    %23 = arith.select %22, %c1_i32_8, %c16_i32_6 : i32
    %24 = vector.broadcast %23 : i32 to vector<16x1xi32>
    %25 = arith.remsi %3, %24 : vector<16x1xi32>
    %c0_i32_9 = arith.constant 0 : i32
    %26 = vector.broadcast %c0_i32_9 : i32 to vector<16x1xi32>
    %27 = arith.cmpi ne, %25, %26 : vector<16x1xi32>
    %c0_i32_10 = arith.constant 0 : i32
    %28 = vector.broadcast %c0_i32_10 : i32 to vector<16x1xi32>
    %29 = arith.cmpi slt, %25, %28 : vector<16x1xi32>
    %c0_i32_11 = arith.constant 0 : i32
    %30 = arith.cmpi slt, %23, %c0_i32_11 : i32
    %31 = vector.broadcast %30 : i1 to vector<16x1xi1>
    %32 = vector.broadcast %31 : vector<16x1xi1> to vector<16x1xi1>
    %33 = arith.xori %29, %32 : vector<16x1xi1>
    %34 = arith.andi %33, %27 : vector<16x1xi1>
    %35 = vector.broadcast %23 : i32 to vector<16x1xi32>
    %36 = arith.addi %25, %35 : vector<16x1xi32>
    %37 = arith.select %34, %36, %25 : vector<16x1xi1>, vector<16x1xi32>
    %c15_i32 = arith.constant 15 : i32
    %38 = vector.broadcast %c15_i32 : i32 to vector<16x1xi32>
    %39 = arith.cmpi eq, %37, %38 : vector<16x1xi32>
    %c1_i32_12 = arith.constant 1 : i32
    %40 = tpu.dynamic_rotate %2 by %c1_i32_12 dim 0 : vector<16x32xf32>, i32 -> vector<16x32xf32>
    %cst = arith.constant 0.000000e+00 : f32
    %41 = vector.shape_cast %21 : vector<16x1xi1> to vector<16x1xi1>
    %42 = vector.broadcast %41 : vector<16x1xi1> to vector<16x32xi1>
    %43 = vector.broadcast %cst : f32 to vector<16x32xf32>
    %44 = arith.select %42, %43, %40 : vector<16x32xi1>, vector<16x32xf32>
    %c15_i32_13 = arith.constant 15 : i32
    %45 = tpu.dynamic_rotate %2 by %c15_i32_13 dim 0 : vector<16x32xf32>, i32 -> vector<16x32xf32>
    %cst_14 = arith.constant 0.000000e+00 : f32
    %46 = vector.shape_cast %39 : vector<16x1xi1> to vector<16x1xi1>
    %47 = vector.broadcast %46 : vector<16x1xi1> to vector<16x32xi1>
    %48 = vector.broadcast %cst_14 : f32 to vector<16x32xf32>
    %49 = arith.select %47, %48, %45 : vector<16x32xi1>, vector<16x32xf32>
    %50 = tpu.concatenate %44, %2, %49 in 1 : vector<16x32xf32>, vector<16x32xf32>, vector<16x32xf32> -> vector<16x96xf32>
    %c0_15 = arith.constant 0 : index
    %c0_16 = arith.constant 0 : index
    %51 = vector.load %arg2[%c0_15, %c0_16] : memref<96x16xf32, #tpu.memory_space<vmem>>, vector<96x16xf32>
    %cst_17 = arith.constant dense<0.000000e+00> : vector<16x16xf32>
    %52 = tpu.matmul %50, %51, %cst_17 {dimension_numbers = #tpu.dot_dimension_numbers<[1], [0], [0], [1], [0, 0, 1, 1], [], []>} : vector<16x96xf32>, vector<96x16xf32>, vector<16x16xf32> -> vector<16x16xf32>
    %c0_18 = arith.constant 0 : index
    %c0_19 = arith.constant 0 : index
    %53 = vector.load %arg3[%c0_18, %c0_19] : memref<1x16xf32, #tpu.memory_space<vmem>>, vector<1x16xf32>
    %54 = vector.broadcast %53 : vector<1x16xf32> to vector<16x16xf32>
    %55 = arith.addf %52, %54 : vector<16x16xf32>
    %cst_20 = arith.constant 0.000000e+00 : f32
    %56 = vector.broadcast %cst_20 : f32 to vector<16x16xf32>
    %57 = arith.maximumf %55, %56 : vector<16x16xf32>
    %c1_i32_21 = arith.constant 1 : i32
    %58 = tpu.dynamic_rotate %57 by %c1_i32_21 dim 0 : vector<16x16xf32>, i32 -> vector<16x16xf32>
    %cst_22 = arith.constant 0.000000e+00 : f32
    %59 = vector.shape_cast %21 : vector<16x1xi1> to vector<16x1xi1>
    %60 = vector.broadcast %59 : vector<16x1xi1> to vector<16x16xi1>
    %61 = vector.broadcast %cst_22 : f32 to vector<16x16xf32>
    %62 = arith.select %60, %61, %58 : vector<16x16xi1>, vector<16x16xf32>
    %c15_i32_23 = arith.constant 15 : i32
    %63 = tpu.dynamic_rotate %57 by %c15_i32_23 dim 0 : vector<16x16xf32>, i32 -> vector<16x16xf32>
    %cst_24 = arith.constant 0.000000e+00 : f32
    %64 = vector.shape_cast %39 : vector<16x1xi1> to vector<16x1xi1>
    %65 = vector.broadcast %64 : vector<16x1xi1> to vector<16x16xi1>
    %66 = vector.broadcast %cst_24 : f32 to vector<16x16xf32>
    %67 = arith.select %65, %66, %63 : vector<16x16xi1>, vector<16x16xf32>
    %68 = tpu.concatenate %62, %57, %67 in 1 : vector<16x16xf32>, vector<16x16xf32>, vector<16x16xf32> -> vector<16x48xf32>
    %c0_25 = arith.constant 0 : index
    %c0_26 = arith.constant 0 : index
    %69 = vector.load %arg4[%c0_25, %c0_26] : memref<48x16xf32, #tpu.memory_space<vmem>>, vector<48x16xf32>
    %cst_27 = arith.constant dense<0.000000e+00> : vector<16x16xf32>
    %70 = tpu.matmul %68, %69, %cst_27 {dimension_numbers = #tpu.dot_dimension_numbers<[1], [0], [0], [1], [0, 0, 1, 1], [], []>} : vector<16x48xf32>, vector<48x16xf32>, vector<16x16xf32> -> vector<16x16xf32>
    %c0_28 = arith.constant 0 : index
    %c0_29 = arith.constant 0 : index
    %71 = vector.load %arg5[%c0_28, %c0_29] : memref<1x16xf32, #tpu.memory_space<vmem>>, vector<1x16xf32>
    %72 = vector.broadcast %71 : vector<1x16xf32> to vector<16x16xf32>
    %73 = arith.addf %70, %72 : vector<16x16xf32>
    %cst_30 = arith.constant 0.000000e+00 : f32
    %74 = vector.broadcast %cst_30 : f32 to vector<16x16xf32>
    %75 = arith.maximumf %73, %74 : vector<16x16xf32>
    %c1_i32_31 = arith.constant 1 : i32
    %76 = tpu.dynamic_rotate %75 by %c1_i32_31 dim 0 : vector<16x16xf32>, i32 -> vector<16x16xf32>
    %cst_32 = arith.constant 0.000000e+00 : f32
    %77 = vector.shape_cast %21 : vector<16x1xi1> to vector<16x1xi1>
    %78 = vector.broadcast %77 : vector<16x1xi1> to vector<16x16xi1>
    %79 = vector.broadcast %cst_32 : f32 to vector<16x16xf32>
    %80 = arith.select %78, %79, %76 : vector<16x16xi1>, vector<16x16xf32>
    %c15_i32_33 = arith.constant 15 : i32
    %81 = tpu.dynamic_rotate %75 by %c15_i32_33 dim 0 : vector<16x16xf32>, i32 -> vector<16x16xf32>
    %cst_34 = arith.constant 0.000000e+00 : f32
    %82 = vector.shape_cast %39 : vector<16x1xi1> to vector<16x1xi1>
    %83 = vector.broadcast %82 : vector<16x1xi1> to vector<16x16xi1>
    %84 = vector.broadcast %cst_34 : f32 to vector<16x16xf32>
    %85 = arith.select %83, %84, %81 : vector<16x16xi1>, vector<16x16xf32>
    %86 = tpu.concatenate %80, %75, %85 in 1 : vector<16x16xf32>, vector<16x16xf32>, vector<16x16xf32> -> vector<16x48xf32>
    %c0_35 = arith.constant 0 : index
    %c0_36 = arith.constant 0 : index
    %87 = vector.load %arg6[%c0_35, %c0_36] : memref<48x32xf32, #tpu.memory_space<vmem>>, vector<48x32xf32>
    %cst_37 = arith.constant dense<0.000000e+00> : vector<16x32xf32>
    %88 = tpu.matmul %86, %87, %cst_37 {dimension_numbers = #tpu.dot_dimension_numbers<[1], [0], [0], [1], [0, 0, 1, 1], [], []>} : vector<16x48xf32>, vector<48x32xf32>, vector<16x32xf32> -> vector<16x32xf32>
    %c0_38 = arith.constant 0 : index
    %c0_39 = arith.constant 0 : index
    %89 = vector.load %arg7[%c0_38, %c0_39] : memref<1x32xf32, #tpu.memory_space<vmem>>, vector<1x32xf32>
    %90 = vector.broadcast %89 : vector<1x32xf32> to vector<16x32xf32>
    %91 = arith.addf %88, %90 : vector<16x32xf32>
    %92 = arith.addf %2, %91 : vector<16x32xf32>
    %93 = vector.shape_cast %92 : vector<16x32xf32> to vector<1x16x32xf32>
    %cst_40 = arith.constant dense<0.000000e+00> : vector<1x32xf32>
    %94 = vector.multi_reduction <add>, %93, %cst_40 [1] : vector<1x16x32xf32> to vector<1x32xf32>
    %95 = vector.shape_cast %94 : vector<1x32xf32> to vector<1x1x32xf32>
    %cst_41 = arith.constant 1.600000e+01 : f32
    %96 = vector.broadcast %cst_41 : f32 to vector<1x1x32xf32>
    %97 = arith.divf %95, %96 : vector<1x1x32xf32>
    %98 = vector.broadcast %97 : vector<1x1x32xf32> to vector<1x16x32xf32>
    %99 = arith.subf %93, %98 : vector<1x16x32xf32>
    %100 = arith.mulf %99, %99 : vector<1x16x32xf32>
    %cst_42 = arith.constant dense<0.000000e+00> : vector<1x32xf32>
    %101 = vector.multi_reduction <add>, %100, %cst_42 [1] : vector<1x16x32xf32> to vector<1x32xf32>
    %102 = vector.shape_cast %101 : vector<1x32xf32> to vector<1x1x32xf32>
    %cst_43 = arith.constant 1.600000e+01 : f32
    %103 = vector.broadcast %cst_43 : f32 to vector<1x1x32xf32>
    %104 = arith.divf %102, %103 : vector<1x1x32xf32>
    %105 = vector.broadcast %97 : vector<1x1x32xf32> to vector<1x16x32xf32>
    %106 = arith.subf %93, %105 : vector<1x16x32xf32>
    %cst_44 = arith.constant 9.99999974E-6 : f32
    %107 = vector.broadcast %cst_44 : f32 to vector<1x1x32xf32>
    %108 = arith.addf %104, %107 : vector<1x1x32xf32>
    %109 = math.rsqrt %108 : vector<1x1x32xf32>
    %110 = vector.broadcast %109 : vector<1x1x32xf32> to vector<1x16x32xf32>
    %111 = arith.mulf %106, %110 : vector<1x16x32xf32>
    %cst_45 = arith.constant 0.000000e+00 : f32
    %112 = vector.broadcast %cst_45 : f32 to vector<1x16x32xf32>
    %113 = arith.maximumf %111, %112 : vector<1x16x32xf32>
    %114 = vector.shape_cast %113 : vector<1x16x32xf32> to vector<16x32xf32>
    %c15_i32_46 = arith.constant 15 : i32
    %115 = tpu.dynamic_rotate %114 by %c15_i32_46 dim 0 : vector<16x32xf32>, i32 -> vector<16x32xf32>
    %116 = arith.maximumf %114, %115 : vector<16x32xf32>
    %117 = vector.shape_cast %116 : vector<16x32xf32> to vector<8x2x32xf32>
    %118 = vector.extract_strided_slice %117 {offsets = [0, 0, 0], sizes = [8, 1, 32], strides = [1, 1, 1]} : vector<8x2x32xf32> to vector<8x1x32xf32>
    %119 = vector.shape_cast %118 : vector<8x1x32xf32> to vector<8x32xf32>
    %c0_47 = arith.constant 0 : index
    %c0_48 = arith.constant 0 : index
    %120 = vector.load %arg8[%c0_47, %c0_48] : memref<1x32xf32, #tpu.memory_space<vmem>>, vector<1x32xf32>
    %121 = vector.broadcast %120 : vector<1x32xf32> to vector<8x32xf32>
    %122 = arith.mulf %119, %121 : vector<8x32xf32>
    %c0_49 = arith.constant 0 : index
    %c0_50 = arith.constant 0 : index
    %123 = vector.load %arg9[%c0_49, %c0_50] : memref<1x32xf32, #tpu.memory_space<vmem>>, vector<1x32xf32>
    %124 = vector.broadcast %123 : vector<1x32xf32> to vector<8x32xf32>
    %125 = arith.addf %122, %124 : vector<8x32xf32>
    %c0_51 = arith.constant 0 : index
    %c0_52 = arith.constant 0 : index
    %126 = vector.load %arg10[%c0_51, %c0_52] : memref<32x96xf32, #tpu.memory_space<vmem>>, vector<32x96xf32>
    %cst_53 = arith.constant dense<0.000000e+00> : vector<8x96xf32>
    %127 = tpu.matmul %125, %126, %cst_53 {dimension_numbers = #tpu.dot_dimension_numbers<[1], [0], [0], [1], [0, 0, 1, 1], [], []>} : vector<8x32xf32>, vector<32x96xf32>, vector<8x96xf32> -> vector<8x96xf32>
    %128 = vector.shape_cast %127 : vector<8x96xf32> to vector<1x8x96xf32>
    %129 = vector.extract_strided_slice %128 {offsets = [0, 0, 0], sizes = [1, 8, 8], strides = [1, 1, 1]} : vector<1x8x96xf32> to vector<1x8x8xf32>
    %130 = vector.extract_strided_slice %128 {offsets = [0, 0, 8], sizes = [1, 8, 8], strides = [1, 1, 1]} : vector<1x8x96xf32> to vector<1x8x8xf32>
    %131 = vector.extract_strided_slice %128 {offsets = [0, 0, 16], sizes = [1, 8, 8], strides = [1, 1, 1]} : vector<1x8x96xf32> to vector<1x8x8xf32>
    %132 = vector.extract_strided_slice %128 {offsets = [0, 0, 24], sizes = [1, 8, 8], strides = [1, 1, 1]} : vector<1x8x96xf32> to vector<1x8x8xf32>
    %133 = tpu.concatenate %129, %130, %131, %132 in 0 : vector<1x8x8xf32>, vector<1x8x8xf32>, vector<1x8x8xf32>, vector<1x8x8xf32> -> vector<4x8x8xf32>
    %134 = vector.extract_strided_slice %128 {offsets = [0, 0, 32], sizes = [1, 8, 8], strides = [1, 1, 1]} : vector<1x8x96xf32> to vector<1x8x8xf32>
    %135 = vector.extract_strided_slice %128 {offsets = [0, 0, 40], sizes = [1, 8, 8], strides = [1, 1, 1]} : vector<1x8x96xf32> to vector<1x8x8xf32>
    %136 = vector.extract_strided_slice %128 {offsets = [0, 0, 48], sizes = [1, 8, 8], strides = [1, 1, 1]} : vector<1x8x96xf32> to vector<1x8x8xf32>
    %137 = vector.extract_strided_slice %128 {offsets = [0, 0, 56], sizes = [1, 8, 8], strides = [1, 1, 1]} : vector<1x8x96xf32> to vector<1x8x8xf32>
    %138 = tpu.concatenate %134, %135, %136, %137 in 0 : vector<1x8x8xf32>, vector<1x8x8xf32>, vector<1x8x8xf32>, vector<1x8x8xf32> -> vector<4x8x8xf32>
    %139 = vector.extract_strided_slice %128 {offsets = [0, 0, 64], sizes = [1, 8, 8], strides = [1, 1, 1]} : vector<1x8x96xf32> to vector<1x8x8xf32>
    %140 = vector.extract_strided_slice %128 {offsets = [0, 0, 72], sizes = [1, 8, 8], strides = [1, 1, 1]} : vector<1x8x96xf32> to vector<1x8x8xf32>
    %141 = vector.extract_strided_slice %128 {offsets = [0, 0, 80], sizes = [1, 8, 8], strides = [1, 1, 1]} : vector<1x8x96xf32> to vector<1x8x8xf32>
    %142 = vector.extract_strided_slice %128 {offsets = [0, 0, 88], sizes = [1, 8, 8], strides = [1, 1, 1]} : vector<1x8x96xf32> to vector<1x8x8xf32>
    %143 = tpu.concatenate %139, %140, %141, %142 in 0 : vector<1x8x8xf32>, vector<1x8x8xf32>, vector<1x8x8xf32>, vector<1x8x8xf32> -> vector<4x8x8xf32>
    "tpu.trace_start"() <{level = 10 : i32, message = "bqd,bkd->bqk"}> : () -> ()
    %cst_54 = arith.constant dense<0.000000e+00> : vector<4x8x8xf32>
    %144 = tpu.matmul %133, %138, %cst_54 {dimension_numbers = #tpu.dot_dimension_numbers<[2], [2], [1], [1], [0, 0, 0, 1, 1, 1], [0], [0]>} : vector<4x8x8xf32>, vector<4x8x8xf32>, vector<4x8x8xf32> -> vector<4x8x8xf32>
    "tpu.trace_stop"() : () -> ()
    %cst_55 = arith.constant 0.176776692 : f32
    %145 = vector.broadcast %cst_55 : f32 to vector<4x8x8xf32>
    %146 = arith.mulf %144, %145 : vector<4x8x8xf32>
    %cst_56 = arith.constant dense<0xFF800000> : vector<4x8xf32>
    %147 = vector.multi_reduction <maximumf>, %146, %cst_56 [2] : vector<4x8x8xf32> to vector<4x8xf32>
    %148 = vector.shape_cast %147 : vector<4x8xf32> to vector<4x8x1xf32>
    %149 = vector.broadcast %148 : vector<4x8x1xf32> to vector<4x8x8xf32>
    %150 = arith.subf %146, %149 : vector<4x8x8xf32>
    %151 = math.exp %150 : vector<4x8x8xf32>
    %cst_57 = arith.constant dense<0.000000e+00> : vector<4x8xf32>
    %152 = vector.multi_reduction <add>, %151, %cst_57 [2] : vector<4x8x8xf32> to vector<4x8xf32>
    %153 = vector.shape_cast %152 : vector<4x8xf32> to vector<4x8x1xf32>
    %154 = tpu.reciprocal %153 : vector<4x8x1xf32> -> vector<4x8x1xf32>
    %155 = vector.broadcast %154 : vector<4x8x1xf32> to vector<4x8x8xf32>
    %156 = arith.mulf %151, %155 : vector<4x8x8xf32>
    "tpu.trace_start"() <{level = 10 : i32, message = "bqk,bkd->bqd"}> : () -> ()
    %cst_58 = arith.constant dense<0.000000e+00> : vector<4x8x8xf32>
    %157 = tpu.matmul %156, %143, %cst_58 {dimension_numbers = #tpu.dot_dimension_numbers<[2], [1], [1], [2], [0, 0, 0, 1, 1, 2], [0], [0]>} : vector<4x8x8xf32>, vector<4x8x8xf32>, vector<4x8x8xf32> -> vector<4x8x8xf32>
    "tpu.trace_stop"() : () -> ()
    %158 = vector.extract_strided_slice %157 {offsets = [0, 0, 0], sizes = [1, 8, 8], strides = [1, 1, 1]} : vector<4x8x8xf32> to vector<1x8x8xf32>
    %159 = vector.extract_strided_slice %157 {offsets = [1, 0, 0], sizes = [1, 8, 8], strides = [1, 1, 1]} : vector<4x8x8xf32> to vector<1x8x8xf32>
    %160 = vector.extract_strided_slice %157 {offsets = [2, 0, 0], sizes = [1, 8, 8], strides = [1, 1, 1]} : vector<4x8x8xf32> to vector<1x8x8xf32>
    %161 = vector.extract_strided_slice %157 {offsets = [3, 0, 0], sizes = [1, 8, 8], strides = [1, 1, 1]} : vector<4x8x8xf32> to vector<1x8x8xf32>
    %162 = tpu.concatenate %158, %159, %160, %161 in 2 : vector<1x8x8xf32>, vector<1x8x8xf32>, vector<1x8x8xf32>, vector<1x8x8xf32> -> vector<1x8x32xf32>
    %163 = vector.shape_cast %162 : vector<1x8x32xf32> to vector<8x32xf32>
    %c0_59 = arith.constant 0 : index
    %c0_60 = arith.constant 0 : index
    %164 = vector.load %arg11[%c0_59, %c0_60] : memref<32x32xf32, #tpu.memory_space<vmem>>, vector<32x32xf32>
    %cst_61 = arith.constant dense<0.000000e+00> : vector<8x32xf32>
    %165 = tpu.matmul %163, %164, %cst_61 {dimension_numbers = #tpu.dot_dimension_numbers<[1], [0], [0], [1], [0, 0, 1, 1], [], []>} : vector<8x32xf32>, vector<32x32xf32>, vector<8x32xf32> -> vector<8x32xf32>
    %166 = arith.addf %125, %165 : vector<8x32xf32>
    %167 = vector.shape_cast %166 : vector<8x32xf32> to vector<1x8x32xf32>
    %168 = tpu.transpose %167, [0, 2, 1] : vector<1x8x32xf32> -> vector<1x32x8xf32>
    %c0_62 = arith.constant 0 : index
    %c0_63 = arith.constant 0 : index
    %c0_64 = arith.constant 0 : index
    %169 = vector.load %arg12[%c0_62, %c0_63, %c0_64] : memref<1x32x8xf32, #tpu.memory_space<vmem>>, vector<1x32x8xf32>
    tpu.vector_store %arg12[%c0_62, %c0_63, %c0_64], %168 {strides = array<i32>} : memref<1x32x8xf32, #tpu.memory_space<vmem>>, vector<1x32x8xf32>,
    return
  }
  func.func @transform_0(%arg0: i32) -> (i32, i32, i32) {
    %c0_i32 = arith.constant 0 : i32
    %c0_i32_0 = arith.constant 0 : i32
    %c0_i32_1 = arith.constant 0 : i32
    return %arg0, %c0_i32, %c0_i32_0 : i32, i32, i32
  }
  func.func @transform_1(%arg0: i32) -> (i32, i32) {
    %c0_i32 = arith.constant 0 : i32
    %c0_i32_0 = arith.constant 0 : i32
    %c0_i32_1 = arith.constant 0 : i32
    return %c0_i32, %c0_i32_0 : i32, i32
  }
  func.func @transform_2(%arg0: i32) -> (i32, i32) {
    %c0_i32 = arith.constant 0 : i32
    %c0_i32_0 = arith.constant 0 : i32
    %c0_i32_1 = arith.constant 0 : i32
    return %c0_i32, %c0_i32_0 : i32, i32
  }
  func.func @transform_3(%arg0: i32) -> (i32, i32) {
    %c0_i32 = arith.constant 0 : i32
    %c0_i32_0 = arith.constant 0 : i32
    %c0_i32_1 = arith.constant 0 : i32
    return %c0_i32, %c0_i32_0 : i32, i32
  }
  func.func @transform_4(%arg0: i32) -> (i32, i32) {
    %c0_i32 = arith.constant 0 : i32
    %c0_i32_0 = arith.constant 0 : i32
    %c0_i32_1 = arith.constant 0 : i32
    return %c0_i32, %c0_i32_0 : i32, i32
  }
  func.func @transform_5(%arg0: i32) -> (i32, i32) {
    %c0_i32 = arith.constant 0 : i32
    %c0_i32_0 = arith.constant 0 : i32
    %c0_i32_1 = arith.constant 0 : i32
    return %c0_i32, %c0_i32_0 : i32, i32
  }
  func.func @transform_6(%arg0: i32) -> (i32, i32) {
    %c0_i32 = arith.constant 0 : i32
    %c0_i32_0 = arith.constant 0 : i32
    %c0_i32_1 = arith.constant 0 : i32
    return %c0_i32, %c0_i32_0 : i32, i32
  }
  func.func @transform_7(%arg0: i32) -> (i32, i32) {
    %c0_i32 = arith.constant 0 : i32
    %c0_i32_0 = arith.constant 0 : i32
    %c0_i32_1 = arith.constant 0 : i32
    return %c0_i32, %c0_i32_0 : i32, i32
  }
  func.func @transform_8(%arg0: i32) -> (i32, i32) {
    %c0_i32 = arith.constant 0 : i32
    %c0_i32_0 = arith.constant 0 : i32
    %c0_i32_1 = arith.constant 0 : i32
    return %c0_i32, %c0_i32_0 : i32, i32
  }
  func.func @transform_9(%arg0: i32) -> (i32, i32) {
    %c0_i32 = arith.constant 0 : i32
    %c0_i32_0 = arith.constant 0 : i32
    %c0_i32_1 = arith.constant 0 : i32
    return %c0_i32, %c0_i32_0 : i32, i32
  }
  func.func @transform_10(%arg0: i32) -> (i32, i32) {
    %c0_i32 = arith.constant 0 : i32
    %c0_i32_0 = arith.constant 0 : i32
    %c0_i32_1 = arith.constant 0 : i32
    return %c0_i32, %c0_i32_0 : i32, i32
  }
  func.func @transform_11(%arg0: i32) -> (i32, i32, i32) {
    %c0_i32 = arith.constant 0 : i32
    %c0_i32_0 = arith.constant 0 : i32
    %c0_i32_1 = arith.constant 0 : i32
    return %arg0, %c0_i32, %c0_i32_0 : i32, i32, i32
  }
}

</mosaic_0001>

<llo_original>
// kernel: tpu_custom_call.1
$region0: #{tpu_custom_call.1}
  #allocation0 [shape = 'u32[]', space=smem, size = 0x4, offset = 0x4, fixed_abs, tag = 'smem constant byte address 0x4 - core index']
  #allocation1 [shape = 'u32[144,128]{1,0:T(1,128)}', space=vmem, size = 0x12000, scoped, tag = 'internal scratch']
  %s0 = inlined_call_operand.vmem [shape: f32[2,32,16], index: 0, kind: input, shape index: {}]
  %s1 = inlined_call_operand.vmem [shape: f32[96,16], index: 1, kind: input, shape index: {}]
  %s2 = inlined_call_operand.vmem [shape: f32[1,16], index: 2, kind: input, shape index: {}]
  %s3 = inlined_call_operand.vmem [shape: f32[48,16], index: 3, kind: input, shape index: {}]
  %s4 = inlined_call_operand.vmem [shape: f32[1,16], index: 4, kind: input, shape index: {}]
  %s5 = inlined_call_operand.vmem [shape: f32[48,32], index: 5, kind: input, shape index: {}]
  %s6 = inlined_call_operand.vmem [shape: f32[1,32], index: 6, kind: input, shape index: {}]
  %s7 = inlined_call_operand.vmem [shape: f32[1,32], index: 7, kind: input, shape index: {}]
  %s8 = inlined_call_operand.vmem [shape: f32[1,32], index: 8, kind: input, shape index: {}]
  %s9 = inlined_call_operand.vmem [shape: f32[32,96], index: 9, kind: input, shape index: {}]
  %s10 = inlined_call_operand.vmem [shape: f32[32,32], index: 10, kind: input, shape index: {}]
  %s11 = inlined_call_operand.vmem [shape: f32[2,32,8], index: 11, kind: output, shape index: {}]
  %s12 = sld [smem:[#allocation0]]
  $region77: #{tpu_custom_call.1} parent=0
    _
  %s14 = ssub.s32 1, %s12
  %s15 = scalar_select 0, %s14, %s12
  loop: start=0, step=1, limit=4
  $region2: #{tpu_custom_call.1} parent=0 // loop_pre_header
    _
  $region3: #{tpu_custom_call.1} parent=0 // loop_header
    %s17 = sphi 0, %s21
    %p18 = scmp.ge.s32.totalorder %s17, 4
    %s27 = sphi 0, %s29
    %s30 = sphi 0, %s27
    %s31 = sphi 0, %s30
    %s47 = sphi 0, %s31
    %s51 = sphi 0, %s51
    %s53 = sphi 0, %s51
    %s54 = sphi 0, %s53
    %s68 = sphi 0, %s54
    %s72 = sphi 0, %s72
    %s74 = sphi 0, %s72
    %s75 = sphi 0, %s74
    %s89 = sphi 0, %s75
    %s93 = sphi 0, %s93
    %s95 = sphi 0, %s93
    %s96 = sphi 0, %s95
    %s110 = sphi 0, %s96
    %s114 = sphi 0, %s114
    %s116 = sphi 0, %s114
    %s117 = sphi 0, %s116
    %s131 = sphi 0, %s117
    %s135 = sphi 0, %s135
    %s137 = sphi 0, %s135
    %s138 = sphi 0, %s137
    %s152 = sphi 0, %s138
    %s156 = sphi 0, %s156
    %s158 = sphi 0, %s156
    %s159 = sphi 0, %s158
    %s173 = sphi 0, %s159
    %s177 = sphi 0, %s177
    %s179 = sphi 0, %s177
    %s180 = sphi 0, %s179
    %s194 = sphi 0, %s180
    %s198 = sphi 0, %s198
    %s200 = sphi 0, %s198
    %s201 = sphi 0, %s200
    %s215 = sphi 0, %s201
    %s219 = sphi 0, %s219
    %s221 = sphi 0, %s219
    %s222 = sphi 0, %s221
    %s236 = sphi 0, %s222
    %s240 = sphi 0, %s240
    %s242 = sphi 0, %s240
    %s243 = sphi 0, %s242
    %s257 = sphi 0, %s243
    %s263 = sphi 0, %s265
    %s266 = sphi 0, %s263
    %s267 = sphi 0, %s266
    %s283 = sphi 0, %s267
  $region4: #{tpu_custom_call.1} parent=0 // loop_header_branch
    %20 = sbr.rel (%p18) target = $region8
  $region5: #{tpu_custom_call.1} parent=0 // loop_body
    %s22 = ssub.s32 %s17, 1
    %s23 = ssub.s32 %s17, 2
    %s24 = sadd.s32 %s17, 1
    %s25 = ssub.s32 %s17, %s24
    %p26 = scmp.eq.s32.totalorder %s25, 0
    %s28 = sadd.s32 %s27, 1
    %s29 = scalar_select %p26, %s27, %s28
    %p32 = pneg %p26
    %p33 = scmp.eq.s32.totalorder %s17, 1
    %p34 = por %p32, %p33
    %p35 = scmp.ne.s32.totalorder %s27, %s30
    %p36 = scmp.eq.s32.totalorder %s17, 0
    %p37 = por %p35, %p36
    %p38 = scmp.ne.s32.totalorder %s27, %s30
    %p39 = scmp.eq.s32.totalorder %s22, 1
    %p40 = por %p38, %p39
    %p41 = scmp.ne.s32.totalorder %s30, %s31
    %p42 = scmp.eq.s32.totalorder %s22, 0
    %p43 = por %p41, %p42
    %p44 = scmp.ne.s32.totalorder %s30, %s31
    %p45 = scmp.eq.s32.totalorder %s23, 1
    %p46 = por %p44, %p45
    %p48 = scmp.ne.s32.totalorder %s31, %s47
    %p49 = scmp.eq.s32.totalorder %s23, 0
    %p50 = por %p48, %p49
    %s52 = sadd.s32 %s51, 1
    %p55 = scmp.eq.s32.totalorder %s17, 1
    %p56 = scmp.ne.s32.totalorder %s51, %s53
    %p57 = scmp.eq.s32.totalorder %s17, 0
    %p58 = por %p56, %p57
    %p59 = scmp.ne.s32.totalorder %s51, %s53
    %p60 = scmp.eq.s32.totalorder %s22, 1
    %p61 = por %p59, %p60
    %p62 = scmp.ne.s32.totalorder %s53, %s54
    %p63 = scmp.eq.s32.totalorder %s22, 0
    %p64 = por %p62, %p63
    %p65 = scmp.ne.s32.totalorder %s53, %s54
    %p66 = scmp.eq.s32.totalorder %s23, 1
    %p67 = por %p65, %p66
    %p69 = scmp.ne.s32.totalorder %s54, %s68
    %p70 = scmp.eq.s32.totalorder %s23, 0
    %p71 = por %p69, %p70
    %s73 = sadd.s32 %s72, 1
    %p76 = scmp.eq.s32.totalorder %s17, 1
    %p77 = scmp.ne.s32.totalorder %s72, %s74
    %p78 = scmp.eq.s32.totalorder %s17, 0
    %p79 = por %p77, %p78
    %p80 = scmp.ne.s32.totalorder %s72, %s74
    %p81 = scmp.eq.s32.totalorder %s22, 1
    %p82 = por %p80, %p81
    %p83 = scmp.ne.s32.totalorder %s74, %s75
    %p84 = scmp.eq.s32.totalorder %s22, 0
    %p85 = por %p83, %p84
    %p86 = scmp.ne.s32.totalorder %s74, %s75
    %p87 = scmp.eq.s32.totalorder %s23, 1
    %p88 = por %p86, %p87
    %p90 = scmp.ne.s32.totalorder %s75, %s89
    %p91 = scmp.eq.s32.totalorder %s23, 0
    %p92 = por %p90, %p91
    %s94 = sadd.s32 %s93, 1
    %p97 = scmp.eq.s32.totalorder %s17, 1
    %p98 = scmp.ne.s32.totalorder %s93, %s95
    %p99 = scmp.eq.s32.totalorder %s17, 0
    %p100 = por %p98, %p99
    %p101 = scmp.ne.s32.totalorder %s93, %s95
    %p102 = scmp.eq.s32.totalorder %s22, 1
    %p103 = por %p101, %p102
    %p104 = scmp.ne.s32.totalorder %s95, %s96
    %p105 = scmp.eq.s32.totalorder %s22, 0
    %p106 = por %p104, %p105
    %p107 = scmp.ne.s32.totalorder %s95, %s96
    %p108 = scmp.eq.s32.totalorder %s23, 1
    %p109 = por %p107, %p108
    %p111 = scmp.ne.s32.totalorder %s96, %s110
    %p112 = scmp.eq.s32.totalorder %s23, 0
    %p113 = por %p111, %p112
    %s115 = sadd.s32 %s114, 1
    %p118 = scmp.eq.s32.totalorder %s17, 1
    %p119 = scmp.ne.s32.totalorder %s114, %s116
    %p120 = scmp.eq.s32.totalorder %s17, 0
    %p121 = por %p119, %p120
    %p122 = scmp.ne.s32.totalorder %s114, %s116
    %p123 = scmp.eq.s32.totalorder %s22, 1
    %p124 = por %p122, %p123
    %p125 = scmp.ne.s32.totalorder %s116, %s117
    %p126 = scmp.eq.s32.totalorder %s22, 0
    %p127 = por %p125, %p126
    %p128 = scmp.ne.s32.totalorder %s116, %s117
    %p129 = scmp.eq.s32.totalorder %s23, 1
    %p130 = por %p128, %p129
    %p132 = scmp.ne.s32.totalorder %s117, %s131
    %p133 = scmp.eq.s32.totalorder %s23, 0
    %p134 = por %p132, %p133
    %s136 = sadd.s32 %s135, 1
    %p139 = scmp.eq.s32.totalorder %s17, 1
    %p140 = scmp.ne.s32.totalorder %s135, %s137
    %p141 = scmp.eq.s32.totalorder %s17, 0
    %p142 = por %p140, %p141
    %p143 = scmp.ne.s32.totalorder %s135, %s137
    %p144 = scmp.eq.s32.totalorder %s22, 1
    %p145 = por %p143, %p144
    %p146 = scmp.ne.s32.totalorder %s137, %s138
    %p147 = scmp.eq.s32.totalorder %s22, 0
    %p148 = por %p146, %p147
    %p149 = scmp.ne.s32.totalorder %s137, %s138
    %p150 = scmp.eq.s32.totalorder %s23, 1
    %p151 = por %p149, %p150
    %p153 = scmp.ne.s32.totalorder %s138, %s152
    %p154 = scmp.eq.s32.totalorder %s23, 0
    %p155 = por %p153, %p154
    %s157 = sadd.s32 %s156, 1
    %p160 = scmp.eq.s32.totalorder %s17, 1
    %p161 = scmp.ne.s32.totalorder %s156, %s158
    %p162 = scmp.eq.s32.totalorder %s17, 0
    %p163 = por %p161, %p162
    %p164 = scmp.ne.s32.totalorder %s156, %s158
    %p165 = scmp.eq.s32.totalorder %s22, 1
    %p166 = por %p164, %p165
    %p167 = scmp.ne.s32.totalorder %s158, %s159
    %p168 = scmp.eq.s32.totalorder %s22, 0
    %p169 = por %p167, %p168
    %p170 = scmp.ne.s32.totalorder %s158, %s159
    %p171 = scmp.eq.s32.totalorder %s23, 1
    %p172 = por %p170, %p171
    %p174 = scmp.ne.s32.totalorder %s159, %s173
    %p175 = scmp.eq.s32.totalorder %s23, 0
    %p176 = por %p174, %p175
    %s178 = sadd.s32 %s177, 1
    %p181 = scmp.eq.s32.totalorder %s17, 1
    %p182 = scmp.ne.s32.totalorder %s177, %s179
    %p183 = scmp.eq.s32.totalorder %s17, 0
    %p184 = por %p182, %p183
    %p185 = scmp.ne.s32.totalorder %s177, %s179
    %p186 = scmp.eq.s32.totalorder %s22, 1
    %p187 = por %p185, %p186
    %p188 = scmp.ne.s32.totalorder %s179, %s180
    %p189 = scmp.eq.s32.totalorder %s22, 0
    %p190 = por %p188, %p189
    %p191 = scmp.ne.s32.totalorder %s179, %s180
    %p192 = scmp.eq.s32.totalorder %s23, 1
    %p193 = por %p191, %p192
    %p195 = scmp.ne.s32.totalorder %s180, %s194
    %p196 = scmp.eq.s32.totalorder %s23, 0
    %p197 = por %p195, %p196
    %s199 = sadd.s32 %s198, 1
    %p202 = scmp.eq.s32.totalorder %s17, 1
    %p203 = scmp.ne.s32.totalorder %s198, %s200
    %p204 = scmp.eq.s32.totalorder %s17, 0
    %p205 = por %p203, %p204
    %p206 = scmp.ne.s32.totalorder %s198, %s200
    %p207 = scmp.eq.s32.totalorder %s22, 1
    %p208 = por %p206, %p207
    %p209 = scmp.ne.s32.totalorder %s200, %s201
    %p210 = scmp.eq.s32.totalorder %s22, 0
    %p211 = por %p209, %p210
    %p212 = scmp.ne.s32.totalorder %s200, %s201
    %p213 = scmp.eq.s32.totalorder %s23, 1
    %p214 = por %p212, %p213
    %p216 = scmp.ne.s32.totalorder %s201, %s215
    %p217 = scmp.eq.s32.totalorder %s23, 0
    %p218 = por %p216, %p217
    %s220 = sadd.s32 %s219, 1
    %p223 = scmp.eq.s32.totalorder %s17, 1
    %p224 = scmp.ne.s32.totalorder %s219, %s221
    %p225 = scmp.eq.s32.totalorder %s17, 0
    %p226 = por %p224, %p225
    %p227 = scmp.ne.s32.totalorder %s219, %s221
    %p228 = scmp.eq.s32.totalorder %s22, 1
    %p229 = por %p227, %p228
    %p230 = scmp.ne.s32.totalorder %s221, %s222
    %p231 = scmp.eq.s32.totalorder %s22, 0
    %p232 = por %p230, %p231
    %p233 = scmp.ne.s32.totalorder %s221, %s222
    %p234 = scmp.eq.s32.totalorder %s23, 1
    %p235 = por %p233, %p234
    %p237 = scmp.ne.s32.totalorder %s222, %s236
    %p238 = scmp.eq.s32.totalorder %s23, 0
    %p239 = por %p237, %p238
    %s241 = sadd.s32 %s240, 1
    %p244 = scmp.eq.s32.totalorder %s17, 1
    %p245 = scmp.ne.s32.totalorder %s240, %s242
    %p246 = scmp.eq.s32.totalorder %s17, 0
    %p247 = por %p245, %p246
    %p248 = scmp.ne.s32.totalorder %s240, %s242
    %p249 = scmp.eq.s32.totalorder %s22, 1
    %p250 = por %p248, %p249
    %p251 = scmp.ne.s32.totalorder %s242, %s243
    %p252 = scmp.eq.s32.totalorder %s22, 0
    %p253 = por %p251, %p252
    %p254 = scmp.ne.s32.totalorder %s242, %s243
    %p255 = scmp.eq.s32.totalorder %s23, 1
    %p256 = por %p254, %p255
    %p258 = scmp.ne.s32.totalorder %s243, %s257
    %p259 = scmp.eq.s32.totalorder %s23, 0
    %p260 = por %p258, %p259
    %s261 = ssub.s32 %s17, %s24
    %p262 = scmp.eq.s32.totalorder %s261, 0
    %s264 = sadd.s32 %s263, 1
    %s265 = scalar_select %p262, %s263, %s264
    %p268 = pneg %p262
    %p269 = scmp.eq.s32.totalorder %s17, 1
    %p270 = por %p268, %p269
    %p271 = scmp.ne.s32.totalorder %s263, %s266
    %p272 = scmp.eq.s32.totalorder %s17, 0
    %p273 = por %p271, %p272
    %p274 = scmp.ne.s32.totalorder %s263, %s266
    %p275 = scmp.eq.s32.totalorder %s22, 1
    %p276 = por %p274, %p275
    %p277 = scmp.ne.s32.totalorder %s266, %s267
    %p278 = scmp.eq.s32.totalorder %s22, 0
    %p279 = por %p277, %p278
    %p280 = scmp.ne.s32.totalorder %s266, %s267
    %p281 = scmp.eq.s32.totalorder %s23, 1
    %p282 = por %p280, %p281
    %p284 = scmp.ne.s32.totalorder %s267, %s283
    %p285 = scmp.eq.s32.totalorder %s23, 0
    %p286 = por %p284, %p285
    %p287 = scmp.le.s32.totalorder 1, %s17
    %p288 = scmp.lt.s32.totalorder %s17, 3
    %p289 = pnand %p287, %p288
    %p290 = pneg %p289
    // Predicated region
    $region9: #{tpu_custom_call.1} parent=5 // pred_check
      _
    $region10: #{tpu_custom_call.1} parent=5 // pred_check_branch
      %292 = sbr.rel (%p289) target = $region12
    $region11: #{tpu_custom_call.1} parent=5 // pred_region
      %s293 = ssub.s32 %s17, 1
      // Predicated region
      $region13: #{tpu_custom_call.1} parent=11 // pred_check
        %p294 = pneg %p64
      $region14: #{tpu_custom_call.1} parent=11 // pred_check_branch
        %296 = sbr.rel (%p294) target = $region16
      $region15: #{tpu_custom_call.1} parent=11 // pred_region
        _
      $region16: #{tpu_custom_call.1} parent=11 // pred_fallthru
        _
      // Predicated region
      $region17: #{tpu_custom_call.1} parent=11 // pred_check
        %p297 = pneg %p85
      $region18: #{tpu_custom_call.1} parent=11 // pred_check_branch
        %299 = sbr.rel (%p297) target = $region20
      $region19: #{tpu_custom_call.1} parent=11 // pred_region
        _
      $region20: #{tpu_custom_call.1} parent=11 // pred_fallthru
        _
      // Predicated region
      $region21: #{tpu_custom_call.1} parent=11 // pred_check
        %p300 = pneg %p106
      $region22: #{tpu_custom_call.1} parent=11 // pred_check_branch
        %302 = sbr.rel (%p300) target = $region24
      $region23: #{tpu_custom_call.1} parent=11 // pred_region
        _
      $region24: #{tpu_custom_call.1} parent=11 // pred_fallthru
        _
      // Predicated region
      $region25: #{tpu_custom_call.1} parent=11 // pred_check
        %p303 = pneg %p127
      $region26: #{tpu_custom_call.1} parent=11 // pred_check_branch
        %305 = sbr.rel (%p303) target = $region28
      $region27: #{tpu_custom_call.1} parent=11 // pred_region
        _
      $region28: #{tpu_custom_call.1} parent=11 // pred_fallthru
        _
      // Predicated region
      $region29: #{tpu_custom_call.1} parent=11 // pred_check
        %p306 = pneg %p148
      $region30: #{tpu_custom_call.1} parent=11 // pred_check_branch
        %308 = sbr.rel (%p306) target = $region32
      $region31: #{tpu_custom_call.1} parent=11 // pred_region
        _
      $region32: #{tpu_custom_call.1} parent=11 // pred_fallthru
        _
      // Predicated region
      $region33: #{tpu_custom_call.1} parent=11 // pred_check
        %p309 = pneg %p169
      $region34: #{tpu_custom_call.1} parent=11 // pred_check_branch
        %311 = sbr.rel (%p309) target = $region36
      $region35: #{tpu_custom_call.1} parent=11 // pred_region
        _
      $region36: #{tpu_custom_call.1} parent=11 // pred_fallthru
        _
      // Predicated region
      $region37: #{tpu_custom_call.1} parent=11 // pred_check
        %p312 = pneg %p190
      $region38: #{tpu_custom_call.1} parent=11 // pred_check_branch
        %314 = sbr.rel (%p312) target = $region40
      $region39: #{tpu_custom_call.1} parent=11 // pred_region
        _
      $region40: #{tpu_custom_call.1} parent=11 // pred_fallthru
        _
      // Predicated region
      $region41: #{tpu_custom_call.1} parent=11 // pred_check
        %p315 = pneg %p211
      $region42: #{tpu_custom_call.1} parent=11 // pred_check_branch
        %317 = sbr.rel (%p315) target = $region44
      $region43: #{tpu_custom_call.1} parent=11 // pred_region
        _
      $region44: #{tpu_custom_call.1} parent=11 // pred_fallthru
        _
      // Predicated region
      $region45: #{tpu_custom_call.1} parent=11 // pred_check
        %p318 = pneg %p232
      $region46: #{tpu_custom_call.1} parent=11 // pred_check_branch
        %320 = sbr.rel (%p318) target = $region48
      $region47: #{tpu_custom_call.1} parent=11 // pred_region
        _
      $region48: #{tpu_custom_call.1} parent=11 // pred_fallthru
        _
      // Predicated region
      $region49: #{tpu_custom_call.1} parent=11 // pred_check
        %p321 = pneg %p253
      $region50: #{tpu_custom_call.1} parent=11 // pred_check_branch
        %323 = sbr.rel (%p321) target = $region52
      $region51: #{tpu_custom_call.1} parent=11 // pred_region
        _
      $region52: #{tpu_custom_call.1} parent=11 // pred_fallthru
        _
    $region12: #{tpu_custom_call.1} parent=5 // pred_fallthru
      _
    %p324 = scmp.lt.s32.totalorder %s17, 2
    // Predicated region
    $region53: #{tpu_custom_call.1} parent=5 // pred_check
      %p325 = pneg %p324
    $region54: #{tpu_custom_call.1} parent=5 // pred_check_branch
      %327 = sbr.rel (%p325) target = $region56
    $region55: #{tpu_custom_call.1} parent=5 // pred_region
      // Predicated region
      $region57: #{tpu_custom_call.1} parent=55 // pred_check
        %p328 = pneg %p37
      $region58: #{tpu_custom_call.1} parent=55 // pred_check_branch
        %330 = sbr.rel (%p328) target = $region60
      $region59: #{tpu_custom_call.1} parent=55 // pred_region
        %p331 = scmp.lt.s32.totalorder %s17, 1
        %s332 = scalar_select %p331, %s17, 1
        %s333 = smul.addr %s332, 4
        %s334 = smul.addr %s333, 8
        %s335 = scalar_lea.vmem %s0, %s334
      $region60: #{tpu_custom_call.1} parent=55 // pred_fallthru
        _
    $region56: #{tpu_custom_call.1} parent=5 // pred_fallthru
      _
    %p336 = scmp.le.s32.totalorder 1, %s17
    %p337 = scmp.lt.s32.totalorder %s17, 3
    %p338 = pnand %p336, %p337
    %p339 = pneg %p338
    // Predicated region
    $region61: #{tpu_custom_call.1} parent=5 // pred_check
      _
    $region62: #{tpu_custom_call.1} parent=5 // pred_check_branch
      %341 = sbr.rel (%p338) target = $region64
    $region63: #{tpu_custom_call.1} parent=5 // pred_region
      %s342 = ssub.s32 %s17, 1
      %p343 = scmp.lt.s32.totalorder %s22, 1
      %s344 = scalar_select %p343, %s22, 1
      %s345 = smul.addr %s344, 4
      %s346 = smul.addr %s345, 8
      %s347 = scalar_lea.vmem %s0, %s346
      %p348 = pneg %p43
      %p349 = pneg %p40
      %p350 = pneg %p64
      %p351 = pneg %p61
      %p352 = pneg %p85
      %p353 = pneg %p82
      %p354 = pneg %p106
      %p355 = pneg %p103
      %p356 = pneg %p127
      %p357 = pneg %p124
      %p358 = pneg %p148
      %p359 = pneg %p145
      %p360 = pneg %p169
      %p361 = pneg %p166
      %p362 = pneg %p190
      %p363 = pneg %p187
      %p364 = pneg %p211
      %p365 = pneg %p208
      %p366 = pneg %p232
      %p367 = pneg %p229
      %p368 = pneg %p253
      %p369 = pneg %p250
      %p370 = pneg %p279
      %p371 = pneg %p276
      %p372 = scmp.lt.s32.totalorder %s22, 1
      %s373 = scalar_select %p372, %s22, 1
      %s374 = smul.addr %s373, 4
      %s375 = smul.addr %s374, 8
      %s376 = scalar_lea.vmem %s11, %s375
      %p377 = scmp.lt.s32.totalorder %s22, 1
      %s378 = scalar_select %p377, %s22, 1
      %s379 = smul.addr %s378, 4
      %s380 = smul.addr %s379, 8
      %s381 = scalar_lea.vmem %s0, %s380
      %p382 = scmp.lt.s32.totalorder %s22, 1
      %s383 = scalar_select %p382, %s22, 1
      %s384 = smul.addr %s383, 4
      %s385 = smul.addr %s384, 8
      %s386 = scalar_lea.vmem %s11, %s385
      %v387 = vld [vmem:[%s381] sm:$0xff]
      %v388 = vld [vmem:[%s381 + $0x8] sm:$0xff]
      %v389 = vld [vmem:[%s381 + $0x10] sm:$0xff]
      %v390 = vld [vmem:[%s381 + $0x18] sm:$0xff]
      %391 = vxpose.xlu0.b32.start [1/16] %v387, 128
      %392 = vxpose.xlu0.b32.cont [2/16] %v388, 128
      %393 = vxpose.xlu0.b32.cont [3/16] %v389, 128
      %394 = vxpose.xlu0.b32.cont [4/16] %v390, 128
      %395 = vxpose.xlu0.b32.cont [5/16] 0.0, 128
      %396 = vxpose.xlu0.b32.cont [6/16] 0.0, 128
      %397 = vxpose.xlu0.b32.cont [7/16] 0.0, 128
      %398 = vxpose.xlu0.b32.cont [8/16] 0.0, 128
      %399 = vxpose.xlu0.b32.cont [9/16] 0.0, 128
      %400 = vxpose.xlu0.b32.cont [10/16] 0.0, 128
      %401 = vxpose.xlu0.b32.cont [11/16] 0.0, 128
      %402 = vxpose.xlu0.b32.cont [12/16] 0.0, 128
      %403 = vxpose.xlu0.b32.cont [13/16] 0.0, 128
      %404 = vxpose.xlu0.b32.cont [14/16] 0.0, 128
      %405 = vxpose.xlu0.b32.cont [15/16] 0.0, 128
      %406 = vxpose.xlu0.b32.end [16/16] 0.0, 128
      %v407 = vpop.trf.xlu0
      %v408 = vpop.trf.xlu0
      %v409 = vpop.trf.xlu0
      %v410 = vpop.trf.xlu0
      %v411 = vpop.trf.xlu0
      %v412 = vpop.trf.xlu0
      %v413 = vpop.trf.xlu0
      %v414 = vpop.trf.xlu0
      %v415 = vpop.trf.xlu0
      %v416 = vpop.trf.xlu0
      %v417 = vpop.trf.xlu0
      %v418 = vpop.trf.xlu0
      %v419 = vpop.trf.xlu0
      %v420 = vpop.trf.xlu0
      %v421 = vpop.trf.xlu0
      %v422 = vpop.trf.xlu0
      %v423 = vlaneseq
      %v424 = vshrl.u32 %v423, 7
      %v425 = vadd.s32 %v424, 8
      %vm426 = vcmp.lt.s32.totalorder %v424, 0
      %v427 = vsub.s32 0, %v424
      %v428 = vsel %vm426, %v427, %v424
      %v429 = vshrl.u32 %v428, 4
      %v430 = vand.u32 %v428, 15
      %v431 = vsub.s32 0, %v430
      %v432 = vsel %vm426, %v431, %v430
      %vm433 = vcmp.lt.s32.totalorder %v425, 0
      %v434 = vsub.s32 0, %v425
      %v435 = vsel %vm433, %v434, %v425
      %v436 = vshrl.u32 %v435, 4
      %v437 = vand.u32 %v435, 15
      %v438 = vsub.s32 0, %v437
      %v439 = vsel %vm433, %v438, %v437
      %vm440 = vcmp.ne.s32.totalorder %v432, 0
      %vm441 = vcmp.ne.s32.totalorder %v439, 0
      %vm442 = vcmp.lt.s32.totalorder %v432, 0
      %vm443 = vcmp.lt.s32.totalorder %v439, 0
      %vm444 = vmand %vm442, %vm440
      %vm445 = vmand %vm443, %vm441
      %v446 = vadd.s32 %v432, 16
      %v447 = vadd.s32 %v439, 16
      %v448 = vsel %vm444, %v446, %v432
      %v449 = vsel %vm445, %v447, %v439
      %vm450 = vcmp.eq.s32.totalorder %v448, 0
      %vm451 = vcmp.eq.s32.totalorder %v449, 0
      %vm452 = vcmp.eq.s32.totalorder %v448, 15
      %vm453 = vcmp.eq.s32.totalorder %v449, 15
      %v454 = vrot.slane %v407, 7
      %v455 = vrot.slane %v408, 7
      %vm456 = vcmp.lt.s32.totalorder %v424, 1
      %v457 = vsel %vm456, %v454, %v455
      %v458 = vsel %vm456, %v455, %v454
      %v459 = vsel %vm450, 1, 0
      %v460 = vsel %vm451, 1, 0
      %vm461 = vcmp.eq.s32.totalorder %v459, 1
      %vm462 = vcmp.eq.s32.totalorder %v460, 1
      %v463 = vsel %vm461, 0.0, %v458
      %v464 = vsel %vm462, 0.0, %v457
      %v465 = vrot.slane %v407, 1
      %v466 = vrot.slane %v408, 1
      %vm467 = vcmp.lt.s32.totalorder %v424, 7
      %v468 = vsel %vm467, %v465, %v466
      %v469 = vsel %vm467, %v466, %v465
      %v470 = vsel %vm452, 1, 0
      %v471 = vsel %vm453, 1, 0
      %vm472 = vcmp.eq.s32.totalorder %v470, 1
      %vm473 = vcmp.eq.s32.totalorder %v471, 1
      %v474 = vsel %vm472, 0.0, %v468
      %v475 = vsel %vm473, 0.0, %v469
      %478 = vrot.lane.b32.xlu0 %v407, 32
      %v479 = vpop.permute.xlu0 %478
      %480 = vrot.lane.b32.xlu0 %v408, 32
      %v481 = vpop.permute.xlu0 %480
      %486 = vrot.lane.b32.xlu0 %v474, 64
      %v487 = vpop.permute.xlu0 %486
      %488 = vrot.lane.b32.xlu0 %v475, 64
      %v489 = vpop.permute.xlu0 %488
      %vm492 = vcmask 261120
      %v493 = vsel %vm492, %v463, %v479
      %v494 = vsel %vm492, %v464, %v481
      %vm495 = vcmask 523264
      %v496 = vsel %vm495, %v493, %v487
      %v497 = vsel %vm495, %v494, %v489
      %v498 = vld [vmem:[%s1] sm:$0xff]
      %v499 = vld [vmem:[%s1 + $0x8] sm:$0xff]
      %v500 = vld [vmem:[%s1 + $0x10] sm:$0xff]
      %v501 = vld [vmem:[%s1 + $0x18] sm:$0xff]
      %v502 = vld [vmem:[%s1 + $0x20] sm:$0xff]
      %v503 = vld [vmem:[%s1 + $0x28] sm:$0xff]
      %v504 = vld [vmem:[%s1 + $0x30] sm:$0xff]
      %v505 = vld [vmem:[%s1 + $0x38] sm:$0xff]
      %v506 = vld [vmem:[%s1 + $0x40] sm:$0xff]
      %v507 = vld [vmem:[%s1 + $0x48] sm:$0xff]
      %v508 = vld [vmem:[%s1 + $0x50] sm:$0xff]
      %v509 = vld [vmem:[%s1 + $0x58] sm:$0xff]
      %v510 = vld [vmem:[%s2] sm:$0x1]
      %v512 = vlaneseq
      %v513 = vshrl.u32 %v512, 7
      %v514 = vsub.s32 0, %v513
      %v515 = vrot.slane %v510, %v514
      %vm517 = vcmask 785408
      %v519 = vsel %vm517, %v496, 0
      %v522 = vsel %vm517, %v497, 0
      %524 = vmatprep.subr.mxu0 0.0
      %525 = vmatpush1.msra.mxu0 %v498
      %526 = vmatprep.subr.mxu0 0.0
      %527 = vmatpush1.msra.mxu0 %v499
      %528 = vmatprep.subr.mxu0 0.0
      %529 = vmatpush1.msra.mxu0 %v500
      %530 = vmatprep.subr.mxu0 0.0
      %531 = vmatpush1.msra.mxu0 %v501
      %532 = vmatprep.subr.mxu0 0.0
      %533 = vmatpush1.msra.mxu0 %v502
      %534 = vmatprep.subr.mxu0 0.0
      %535 = vmatpush1.msra.mxu0 %v503
      %536 = vmatprep.subr.mxu0 0.0
      %537 = vmatpush1.msra.mxu0 %v504
      %538 = vmatprep.subr.mxu0 0.0
      %539 = vmatpush1.msra.mxu0 %v505
      %540 = vmatprep.subr.mxu0 0.0
      %541 = vmatpush1.msra.mxu0 %v506
      %542 = vmatprep.subr.mxu0 0.0
      %543 = vmatpush1.msra.mxu0 %v507
      %544 = vmatprep.subr.mxu0 0.0
      %545 = vmatpush1.msra.mxu0 %v508
      %546 = vmatprep.subr.mxu0 0.0
      %547 = vmatpush1.msra.mxu0 %v509
      %548 = vmatprep.subr.mxu0 0.0
      %549 = vmatpush1.msra.mxu0 0.0
      %550 = vmatprep.subr.mxu0 0.0
      %551 = vmatpush1.msra.mxu0 0.0
      %552 = vmatprep.subr.mxu0 0.0
      %553 = vmatpush1.msra.mxu0 0.0
      %554 = vmatprep.subr.mxu0 0.0
      %555 = vmatpush1.msra.mxu0 0.0
      %556 = vmatprep.subr.mxu0 0.0
      %557 = vmatpush1.msra.mxu0 0.0
      %558 = vmatprep.subr.mxu0 0.0
      %559 = vmatpush1.msra.mxu0 0.0
      %560 = vmatprep.subr.mxu0 0.0
      %561 = vmatpush1.msra.mxu0 0.0
      %562 = vmatprep.subr.mxu0 0.0
      %563 = vmatpush1.msra.mxu0 0.0
      %564 = vmatprep.subr.mxu0 0.0
      %565 = vmatpush1.msra.mxu0 0.0
      %566 = vmatprep.subr.mxu0 0.0
      %567 = vmatpush1.msra.mxu0 0.0
      %568 = vmatprep.subr.mxu0 0.0
      %569 = vmatpush1.msra.mxu0 0.0
      %570 = vmatprep.subr.mxu0 0.0
      %571 = vmatpush1.msra.mxu0 0.0
      %572 = vmatprep.subr.mxu0 0.0
      %573 = vmatpush1.msra.mxu0 0.0
      %574 = vmatprep.subr.mxu0 0.0
      %575 = vmatpush1.msra.mxu0 0.0
      %576 = vmatprep.subr.mxu0 0.0
      %577 = vmatpush1.msra.mxu0 0.0
      %578 = vmatprep.subr.mxu0 0.0
      %579 = vmatpush1.msra.mxu0 0.0
      %580 = vmatprep.subr.mxu0 0.0
      %581 = vmatpush1.msra.mxu0 0.0
      %582 = vmatprep.subr.mxu0 0.0
      %583 = vmatpush1.msra.mxu0 0.0
      %584 = vmatprep.subr.mxu0 0.0
      %585 = vmatpush1.msra.mxu0 0.0
      %586 = vmatprep.subr.mxu0 0.0
      %587 = vmatpush1.msra.mxu0 0.0
      %588 = vmatprep.mubr.f32.mxu0 0.0
      %589 = vmatmul.mubr.f32.gmra.mrb[0].mxu0 %v519
      %v590 = vpop.f32.mrb[0].mxu0
      %v591 = vadd.f32 %v515, %v590
      %v592 = vpop.f32.mrb[0].mxu0
      %593 = vmatprep.mubr.f32.mxu0 0.0
      %594 = vmatmul.mubr.f32.gmra.mrb[0].mxu0 %v522
      %v595 = vpop.f32.mrb[0].mxu0
      %v596 = vadd.f32 %v515, %v595
      %v597 = vpop.f32.mrb[0].mxu0
      %598 = vdwg.mxu0
      %v599 = vmax.f32 %v591, 0.0
      %v600 = vmax.f32 %v596, 0.0
      %v601 = vrot.slane %v599, 7
      %v602 = vrot.slane %v600, 7
      %v603 = vsel %vm456, %v601, %v602
      %v604 = vsel %vm456, %v602, %v601
      %v605 = vsel %vm461, 0.0, %v604
      %v606 = vsel %vm462, 0.0, %v603
      %v607 = vrot.slane %v599, 1
      %v608 = vrot.slane %v600, 1
      %v609 = vsel %vm467, %v607, %v608
      %v610 = vsel %vm467, %v608, %v607
      %v611 = vsel %vm472, 0.0, %v609
      %v612 = vsel %vm473, 0.0, %v610
      %615 = vrot.lane.b32.xlu0 %v599, 16
      %v616 = vpop.permute.xlu0 %615
      %617 = vrot.lane.b32.xlu0 %v600, 16
      %v618 = vpop.permute.xlu0 %617
      %623 = vrot.lane.b32.xlu0 %v611, 32
      %v624 = vpop.permute.xlu0 %623
      %625 = vrot.lane.b32.xlu0 %v612, 32
      %v626 = vpop.permute.xlu0 %625
      %vm629 = vcmask 130048
      %v630 = vsel %vm629, %v605, %v616
      %v631 = vsel %vm629, %v606, %v618
      %v632 = vsel %vm492, %v630, %v624
      %v633 = vsel %vm492, %v631, %v626
      %v634 = vld [vmem:[%s3] sm:$0xff]
      %v635 = vld [vmem:[%s3 + $0x8] sm:$0xff]
      %v636 = vld [vmem:[%s3 + $0x10] sm:$0xff]
      %v637 = vld [vmem:[%s3 + $0x18] sm:$0xff]
      %v638 = vld [vmem:[%s3 + $0x20] sm:$0xff]
      %v639 = vld [vmem:[%s3 + $0x28] sm:$0xff]
      %v640 = vld [vmem:[%s4] sm:$0x1]
      %v642 = vlaneseq
      %v643 = vshrl.u32 %v642, 7
      %v644 = vsub.s32 0, %v643
      %v645 = vrot.slane %v640, %v644
      %vm647 = vcmask 392192
      %v649 = vsel %vm647, %v632, 0
      %v652 = vsel %vm647, %v633, 0
      %654 = vmatprep.subr.mxu0 0.0
      %655 = vmatpush1.msra.mxu0 %v634
      %656 = vmatprep.subr.mxu0 0.0
      %657 = vmatpush1.msra.mxu0 %v635
      %658 = vmatprep.subr.mxu0 0.0
      %659 = vmatpush1.msra.mxu0 %v636
      %660 = vmatprep.subr.mxu0 0.0
      %661 = vmatpush1.msra.mxu0 %v637
      %662 = vmatprep.subr.mxu0 0.0
      %663 = vmatpush1.msra.mxu0 %v638
      %664 = vmatprep.subr.mxu0 0.0
      %665 = vmatpush1.msra.mxu0 %v639
      %666 = vmatprep.subr.mxu0 0.0
      %667 = vmatpush1.msra.mxu0 0.0
      %668 = vmatprep.subr.mxu0 0.0
      %669 = vmatpush1.msra.mxu0 0.0
      %670 = vmatprep.subr.mxu0 0.0
      %671 = vmatpush1.msra.mxu0 0.0
      %672 = vmatprep.subr.mxu0 0.0
      %673 = vmatpush1.msra.mxu0 0.0
      %674 = vmatprep.subr.mxu0 0.0
      %675 = vmatpush1.msra.mxu0 0.0
      %676 = vmatprep.subr.mxu0 0.0
      %677 = vmatpush1.msra.mxu0 0.0
      %678 = vmatprep.subr.mxu0 0.0
      %679 = vmatpush1.msra.mxu0 0.0
      %680 = vmatprep.subr.mxu0 0.0
      %681 = vmatpush1.msra.mxu0 0.0
      %682 = vmatprep.subr.mxu0 0.0
      %683 = vmatpush1.msra.mxu0 0.0
      %684 = vmatprep.subr.mxu0 0.0
      %685 = vmatpush1.msra.mxu0 0.0
      %686 = vmatprep.subr.mxu0 0.0
      %687 = vmatpush1.msra.mxu0 0.0
      %688 = vmatprep.subr.mxu0 0.0
      %689 = vmatpush1.msra.mxu0 0.0
      %690 = vmatprep.subr.mxu0 0.0
      %691 = vmatpush1.msra.mxu0 0.0
      %692 = vmatprep.subr.mxu0 0.0
      %693 = vmatpush1.msra.mxu0 0.0
      %694 = vmatprep.subr.mxu0 0.0
      %695 = vmatpush1.msra.mxu0 0.0
      %696 = vmatprep.subr.mxu0 0.0
      %697 = vmatpush1.msra.mxu0 0.0
      %698 = vmatprep.subr.mxu0 0.0
      %699 = vmatpush1.msra.mxu0 0.0
      %700 = vmatprep.subr.mxu0 0.0
      %701 = vmatpush1.msra.mxu0 0.0
      %702 = vmatprep.subr.mxu0 0.0
      %703 = vmatpush1.msra.mxu0 0.0
      %704 = vmatprep.subr.mxu0 0.0
      %705 = vmatpush1.msra.mxu0 0.0
      %706 = vmatprep.subr.mxu0 0.0
      %707 = vmatpush1.msra.mxu0 0.0
      %708 = vmatprep.subr.mxu0 0.0
      %709 = vmatpush1.msra.mxu0 0.0
      %710 = vmatprep.subr.mxu0 0.0
      %711 = vmatpush1.msra.mxu0 0.0
      %712 = vmatprep.subr.mxu0 0.0
      %713 = vmatpush1.msra.mxu0 0.0
      %714 = vmatprep.subr.mxu0 0.0
      %715 = vmatpush1.msra.mxu0 0.0
      %716 = vmatprep.subr.mxu0 0.0
      %717 = vmatpush1.msra.mxu0 0.0
      %718 = vmatprep.mubr.f32.mxu0 0.0
      %719 = vmatmul.mubr.f32.gmra.mrb[0].mxu0 %v649
      %v720 = vpop.f32.mrb[0].mxu0
      %v721 = vadd.f32 %v645, %v720
      %v722 = vpop.f32.mrb[0].mxu0
      %723 = vmatprep.mubr.f32.mxu0 0.0
      %724 = vmatmul.mubr.f32.gmra.mrb[0].mxu0 %v652
      %v725 = vpop.f32.mrb[0].mxu0
      %v726 = vadd.f32 %v645, %v725
      %v727 = vpop.f32.mrb[0].mxu0
      %728 = vdwg.mxu0
      %v729 = vmax.f32 %v721, 0.0
      %v730 = vmax.f32 %v726, 0.0
      %v731 = vrot.slane %v729, 7
      %v732 = vrot.slane %v730, 7
      %v733 = vsel %vm456, %v731, %v732
      %v734 = vsel %vm456, %v732, %v731
      %v735 = vsel %vm461, 0.0, %v734
      %v736 = vsel %vm462, 0.0, %v733
      %v737 = vrot.slane %v729, 1
      %v738 = vrot.slane %v730, 1
      %v739 = vsel %vm467, %v737, %v738
      %v740 = vsel %vm467, %v738, %v737
      %v741 = vsel %vm472, 0.0, %v739
      %v742 = vsel %vm473, 0.0, %v740
      %745 = vrot.lane.b32.xlu0 %v729, 16
      %v746 = vpop.permute.xlu0 %745
      %747 = vrot.lane.b32.xlu0 %v730, 16
      %v748 = vpop.permute.xlu0 %747
      %753 = vrot.lane.b32.xlu0 %v741, 32
      %v754 = vpop.permute.xlu0 %753
      %755 = vrot.lane.b32.xlu0 %v742, 32
      %v756 = vpop.permute.xlu0 %755
      %v759 = vsel %vm629, %v735, %v746
      %v760 = vsel %vm629, %v736, %v748
      %v761 = vsel %vm492, %v759, %v754
      %v762 = vsel %vm492, %v760, %v756
      %v763 = vld [vmem:[%s5] sm:$0xff]
      %v764 = vld [vmem:[%s5 + $0x8] sm:$0xff]
      %v765 = vld [vmem:[%s5 + $0x10] sm:$0xff]
      %v766 = vld [vmem:[%s5 + $0x18] sm:$0xff]
      %v767 = vld [vmem:[%s5 + $0x20] sm:$0xff]
      %v768 = vld [vmem:[%s5 + $0x28] sm:$0xff]
      %v769 = vld [vmem:[%s6] sm:$0x1]
      %v771 = vlaneseq
      %v772 = vshrl.u32 %v771, 7
      %v773 = vsub.s32 0, %v772
      %v774 = vrot.slane %v769, %v773
      %v777 = vsel %vm647, %v761, 0
      %v780 = vsel %vm647, %v762, 0
      %782 = vmatprep.subr.mxu0 0.0
      %783 = vmatpush1.msra.mxu0 %v763
      %784 = vmatprep.subr.mxu0 0.0
      %785 = vmatpush1.msra.mxu0 %v764
      %786 = vmatprep.subr.mxu0 0.0
      %787 = vmatpush1.msra.mxu0 %v765
      %788 = vmatprep.subr.mxu0 0.0
      %789 = vmatpush1.msra.mxu0 %v766
      %790 = vmatprep.subr.mxu0 0.0
      %791 = vmatpush1.msra.mxu0 %v767
      %792 = vmatprep.subr.mxu0 0.0
      %793 = vmatpush1.msra.mxu0 %v768
      %794 = vmatprep.subr.mxu0 0.0
      %795 = vmatpush1.msra.mxu0 0.0
      %796 = vmatprep.subr.mxu0 0.0
      %797 = vmatpush1.msra.mxu0 0.0
      %798 = vmatprep.subr.mxu0 0.0
      %799 = vmatpush1.msra.mxu0 0.0
      %800 = vmatprep.subr.mxu0 0.0
      %801 = vmatpush1.msra.mxu0 0.0
      %802 = vmatprep.subr.mxu0 0.0
      %803 = vmatpush1.msra.mxu0 0.0
      %804 = vmatprep.subr.mxu0 0.0
      %805 = vmatpush1.msra.mxu0 0.0
      %806 = vmatprep.subr.mxu0 0.0
      %807 = vmatpush1.msra.mxu0 0.0
      %808 = vmatprep.subr.mxu0 0.0
      %809 = vmatpush1.msra.mxu0 0.0
      %810 = vmatprep.subr.mxu0 0.0
      %811 = vmatpush1.msra.mxu0 0.0
      %812 = vmatprep.subr.mxu0 0.0
      %813 = vmatpush1.msra.mxu0 0.0
      %814 = vmatprep.subr.mxu0 0.0
      %815 = vmatpush1.msra.mxu0 0.0
      %816 = vmatprep.subr.mxu0 0.0
      %817 = vmatpush1.msra.mxu0 0.0
      %818 = vmatprep.subr.mxu0 0.0
      %819 = vmatpush1.msra.mxu0 0.0
      %820 = vmatprep.subr.mxu0 0.0
      %821 = vmatpush1.msra.mxu0 0.0
      %822 = vmatprep.subr.mxu0 0.0
      %823 = vmatpush1.msra.mxu0 0.0
      %824 = vmatprep.subr.mxu0 0.0
      %825 = vmatpush1.msra.mxu0 0.0
      %826 = vmatprep.subr.mxu0 0.0
      %827 = vmatpush1.msra.mxu0 0.0
      %828 = vmatprep.subr.mxu0 0.0
      %829 = vmatpush1.msra.mxu0 0.0
      %830 = vmatprep.subr.mxu0 0.0
      %831 = vmatpush1.msra.mxu0 0.0
      %832 = vmatprep.subr.mxu0 0.0
      %833 = vmatpush1.msra.mxu0 0.0
      %834 = vmatprep.subr.mxu0 0.0
      %835 = vmatpush1.msra.mxu0 0.0
      %836 = vmatprep.subr.mxu0 0.0
      %837 = vmatpush1.msra.mxu0 0.0
      %838 = vmatprep.subr.mxu0 0.0
      %839 = vmatpush1.msra.mxu0 0.0
      %840 = vmatprep.subr.mxu0 0.0
      %841 = vmatpush1.msra.mxu0 0.0
      %842 = vmatprep.subr.mxu0 0.0
      %843 = vmatpush1.msra.mxu0 0.0
      %844 = vmatprep.subr.mxu0 0.0
      %845 = vmatpush1.msra.mxu0 0.0
      %846 = vmatprep.mubr.f32.mxu0 0.0
      %847 = vmatmul.mubr.f32.gmra.mrb[0].mxu0 %v777
      %v848 = vpop.f32.mrb[0].mxu0
      %v849 = vadd.f32 %v774, %v848
      %v850 = vpop.f32.mrb[0].mxu0
      %851 = vmatprep.mubr.f32.mxu0 0.0
      %852 = vmatmul.mubr.f32.gmra.mrb[0].mxu0 %v780
      %v853 = vpop.f32.mrb[0].mxu0
      %v854 = vadd.f32 %v774, %v853
      %v855 = vpop.f32.mrb[0].mxu0
      %856 = vdwg.mxu0
      %v857 = vadd.f32 %v407, %v849
      %v858 = vadd.f32 %v408, %v854
      %v859 = vsel %vm492, %v857, 0.0
      %v860 = vsel %vm492, %v858, 0.0
      %v861 = vadd.f32 %v859, %v860
      %v862 = vrot.slane %v861, 4
      %v863 = vadd.f32 %v861, %v862
      %v864 = vrot.slane %v863, 2
      %v865 = vadd.f32 %v863, %v864
      %v866 = vrot.slane %v865, 1
      %v867 = vadd.f32 %v865, %v866
      %v868 = vrcp.pop 16.0
      %v869 = vmul.f32 %v867, %v868
      %v870 = vsub.f32 %v857, %v869
      %v871 = vsub.f32 %v858, %v869
      %v872 = vmul.f32 %v870, %v870
      %v873 = vmul.f32 %v871, %v871
      %v874 = vsel %vm492, %v872, 0.0
      %v875 = vsel %vm492, %v873, 0.0
      %v876 = vadd.f32 %v874, %v875
      %v877 = vrot.slane %v876, 4
      %v878 = vadd.f32 %v876, %v877
      %v879 = vrot.slane %v878, 2
      %v880 = vadd.f32 %v878, %v879
      %v881 = vrot.slane %v880, 1
      %v882 = vadd.f32 %v880, %v881
      %v883 = vmul.f32 %v882, %v868
      %v884 = vadd.f32 %v883, 1e-05
      %v885 = vrsqrt.pop %v884
      %v886 = vmul.f32 %v870, %v885
      %v887 = vmul.f32 %v871, %v885
      %v888 = vmax.f32 %v886, 0.0
      %v889 = vmax.f32 %v887, 0.0
      %v890 = vrot.slane %v888, 1
      %v891 = vrot.slane %v889, 1
      %v892 = vsel %vm467, %v890, %v891
      %v893 = vsel %vm467, %v891, %v890
      %v894 = vmax.f32 %v888, %v892
      %v895 = vmax.f32 %v889, %v893
      %v898 = vcombine.high %v894, %v894
      %v900 = vunpack.c.l.s4 1983009808
      %v901 = vunpack.c.0.s8 %v900
      %v902 = vlaneseq
      %v903 = vshrl.u32 %v902, 7
      %v904 = vsub.s32 %v901, %v903
      %v905 = vrot.slane %v894, %v904
      %v907 = vunpack.c.l.s4 1983009808
      %v908 = vunpack.c.0.s8 %v907
      %v909 = vlaneseq
      %v910 = vshrl.u32 %v909, 7
      %v911 = vsub.s32 %v908, %v910
      %v912 = vrot.slane %v898, %v911
      %v913 = vcombine.high %v905, %v905
      %v914 = vcombine.high %v912, %v912
      %v915 = vcombine.high %v895, %v895
      %v917 = vunpack.c.l.s4 1983009808
      %v918 = vunpack.c.0.s8 %v917
      %v919 = vlaneseq
      %v920 = vshrl.u32 %v919, 7
      %v921 = vsub.s32 %v918, %v920
      %v922 = vrot.slane %v895, %v921
      %v924 = vunpack.c.l.s4 1983009808
      %v925 = vunpack.c.0.s8 %v924
      %v926 = vlaneseq
      %v927 = vshrl.u32 %v926, 7
      %v928 = vsub.s32 %v925, %v927
      %v929 = vrot.slane %v915, %v928
      %v930 = vcombine.high %v922, %v922
      %v931 = vcombine.high %v929, %v929
      %v940 = vld [vmem:[%s7] sm:$0x1]
      %v942 = vlaneseq
      %v943 = vshrl.u32 %v942, 7
      %v944 = vsub.s32 0, %v943
      %v945 = vrot.slane %v940, %v944
      %v946 = vcombine.high %v945, %v945
      %v948 = vunpack.c.l.s4 1983009808
      %v949 = vunpack.c.0.s8 %v948
      %v950 = vlaneseq
      %v951 = vshrl.u32 %v950, 7
      %v952 = vsub.s32 %v949, %v951
      %v953 = vrot.slane %v945, %v952
      %v955 = vunpack.c.l.s4 1983009808
      %v956 = vunpack.c.0.s8 %v955
      %v957 = vlaneseq
      %v958 = vshrl.u32 %v957, 7
      %v959 = vsub.s32 %v956, %v958
      %v960 = vrot.slane %v946, %v959
      %v961 = vcombine.high %v953, %v953
      %v962 = vcombine.high %v960, %v960
      %v963 = vrot.slane %v953, 1
      %v964 = vrot.slane %v961, 1
      %v965 = vrot.slane %v960, 1
      %v966 = vrot.slane %v962, 1
      %v975 = vmul.f32 %v905, %v953
      %v976 = vmul.f32 %v913, %v963
      %v977 = vmul.f32 %v912, %v961
      %v978 = vmul.f32 %v914, %v964
      %v979 = vmul.f32 %v922, %v960
      %v980 = vmul.f32 %v930, %v965
      %v981 = vmul.f32 %v929, %v962
      %v982 = vmul.f32 %v931, %v966
      %v983 = vld [vmem:[%s8] sm:$0x1]
      %v985 = vlaneseq
      %v986 = vshrl.u32 %v985, 7
      %v987 = vsub.s32 0, %v986
      %v988 = vrot.slane %v983, %v987
      %v989 = vcombine.high %v988, %v988
      %v991 = vunpack.c.l.s4 1983009808
      %v992 = vunpack.c.0.s8 %v991
      %v993 = vlaneseq
      %v994 = vshrl.u32 %v993, 7
      %v995 = vsub.s32 %v992, %v994
      %v996 = vrot.slane %v988, %v995
      %v998 = vunpack.c.l.s4 1983009808
      %v999 = vunpack.c.0.s8 %v998
      %v1000 = vlaneseq
      %v1001 = vshrl.u32 %v1000, 7
      %v1002 = vsub.s32 %v999, %v1001
      %v1003 = vrot.slane %v989, %v1002
      %v1004 = vcombine.high %v996, %v996
      %v1005 = vcombine.high %v1003, %v1003
      %v1006 = vrot.slane %v996, 1
      %v1007 = vrot.slane %v1004, 1
      %v1008 = vrot.slane %v1003, 1
      %v1009 = vrot.slane %v1005, 1
      %v1018 = vadd.f32 %v975, %v996
      %v1019 = vadd.f32 %v976, %v1006
      %v1020 = vadd.f32 %v977, %v1004
      %v1021 = vadd.f32 %v978, %v1007
      %v1022 = vadd.f32 %v979, %v1003
      %v1023 = vadd.f32 %v980, %v1008
      %v1024 = vadd.f32 %v981, %v1005
      %v1025 = vadd.f32 %v982, %v1009
      %v1026 = vld [vmem:[%s9] sm:$0xff]
      %v1027 = vld [vmem:[%s9 + $0x8] sm:$0xff]
      %v1028 = vld [vmem:[%s9 + $0x10] sm:$0xff]
      %v1029 = vld [vmem:[%s9 + $0x18] sm:$0xff]
      %v1038 = vlaneseq
      %v1039 = vshrl.u32 %v1038, 7
      %v1040 = vsub.s32 0, %v1039
      %v1041 = vrot.slane %v1018, %v1040
      %v1042 = vlaneseq
      %v1043 = vshrl.u32 %v1042, 7
      %v1044 = vsub.s32 0, %v1043
      %v1045 = vrot.slane %v1019, %v1044
      %v1046 = vlaneseq
      %v1047 = vshrl.u32 %v1046, 7
      %v1048 = vsub.s32 0, %v1047
      %v1049 = vrot.slane %v1020, %v1048
      %v1050 = vlaneseq
      %v1051 = vshrl.u32 %v1050, 7
      %v1052 = vsub.s32 0, %v1051
      %v1053 = vrot.slane %v1021, %v1052
      %v1054 = vlaneseq
      %v1055 = vshrl.u32 %v1054, 7
      %v1056 = vsub.s32 0, %v1055
      %v1057 = vrot.slane %v1022, %v1056
      %v1058 = vlaneseq
      %v1059 = vshrl.u32 %v1058, 7
      %v1060 = vsub.s32 0, %v1059
      %v1061 = vrot.slane %v1023, %v1060
      %v1062 = vlaneseq
      %v1063 = vshrl.u32 %v1062, 7
      %v1064 = vsub.s32 0, %v1063
      %v1065 = vrot.slane %v1024, %v1064
      %v1066 = vlaneseq
      %v1067 = vshrl.u32 %v1066, 7
      %v1068 = vsub.s32 0, %v1067
      %v1069 = vrot.slane %v1025, %v1068
      %vm1070 = vcmask 1041409
      %v1071 = vsel %vm1070, %v1045, %v1041
      %vm1072 = vcmask 1042434
      %v1073 = vsel %vm1072, %v1049, %v1071
      %vm1074 = vcmask 1043459
      %v1075 = vsel %vm1074, %v1053, %v1073
      %vm1076 = vcmask 1044484
      %v1077 = vsel %vm1076, %v1057, %v1075
      %vm1078 = vcmask 1045509
      %v1079 = vsel %vm1078, %v1061, %v1077
      %vm1080 = vcmask 1046534
      %v1081 = vsel %vm1080, %v1065, %v1079
      %vm1082 = vcmask 1047559
      %v1083 = vsel %vm1082, %v1069, %v1081
      %v1084 = vsel %vm492, %v1083, 0
      %1086 = vmatprep.subr.mxu0 0.0
      %1087 = vmatpush1.msra.mxu0 %v1026
      %1088 = vmatprep.subr.mxu0 0.0
      %1089 = vmatpush1.msra.mxu0 %v1027
      %1090 = vmatprep.subr.mxu0 0.0
      %1091 = vmatpush1.msra.mxu0 %v1028
      %1092 = vmatprep.subr.mxu0 0.0
      %1093 = vmatpush1.msra.mxu0 %v1029
      %1094 = vmatprep.subr.mxu0 0.0
      %1095 = vmatpush1.msra.mxu0 0.0
      %1096 = vmatprep.subr.mxu0 0.0
      %1097 = vmatpush1.msra.mxu0 0.0
      %1098 = vmatprep.subr.mxu0 0.0
      %1099 = vmatpush1.msra.mxu0 0.0
      %1100 = vmatprep.subr.mxu0 0.0
      %1101 = vmatpush1.msra.mxu0 0.0
      %1102 = vmatprep.subr.mxu0 0.0
      %1103 = vmatpush1.msra.mxu0 0.0
      %1104 = vmatprep.subr.mxu0 0.0
      %1105 = vmatpush1.msra.mxu0 0.0
      %1106 = vmatprep.subr.mxu0 0.0
      %1107 = vmatpush1.msra.mxu0 0.0
      %1108 = vmatprep.subr.mxu0 0.0
      %1109 = vmatpush1.msra.mxu0 0.0
      %1110 = vmatprep.subr.mxu0 0.0
      %1111 = vmatpush1.msra.mxu0 0.0
      %1112 = vmatprep.subr.mxu0 0.0
      %1113 = vmatpush1.msra.mxu0 0.0
      %1114 = vmatprep.subr.mxu0 0.0
      %1115 = vmatpush1.msra.mxu0 0.0
      %1116 = vmatprep.subr.mxu0 0.0
      %1117 = vmatpush1.msra.mxu0 0.0
      %1118 = vmatprep.subr.mxu0 0.0
      %1119 = vmatpush1.msra.mxu0 0.0
      %1120 = vmatprep.subr.mxu0 0.0
      %1121 = vmatpush1.msra.mxu0 0.0
      %1122 = vmatprep.subr.mxu0 0.0
      %1123 = vmatpush1.msra.mxu0 0.0
      %1124 = vmatprep.subr.mxu0 0.0
      %1125 = vmatpush1.msra.mxu0 0.0
      %1126 = vmatprep.subr.mxu0 0.0
      %1127 = vmatpush1.msra.mxu0 0.0
      %1128 = vmatprep.subr.mxu0 0.0
      %1129 = vmatpush1.msra.mxu0 0.0
      %1130 = vmatprep.subr.mxu0 0.0
      %1131 = vmatpush1.msra.mxu0 0.0
      %1132 = vmatprep.subr.mxu0 0.0
      %1133 = vmatpush1.msra.mxu0 0.0
      %1134 = vmatprep.subr.mxu0 0.0
      %1135 = vmatpush1.msra.mxu0 0.0
      %1136 = vmatprep.subr.mxu0 0.0
      %1137 = vmatpush1.msra.mxu0 0.0
      %1138 = vmatprep.subr.mxu0 0.0
      %1139 = vmatpush1.msra.mxu0 0.0
      %1140 = vmatprep.subr.mxu0 0.0
      %1141 = vmatpush1.msra.mxu0 0.0
      %1142 = vmatprep.subr.mxu0 0.0
      %1143 = vmatpush1.msra.mxu0 0.0
      %1144 = vmatprep.subr.mxu0 0.0
      %1145 = vmatpush1.msra.mxu0 0.0
      %1146 = vmatprep.subr.mxu0 0.0
      %1147 = vmatpush1.msra.mxu0 0.0
      %1148 = vmatprep.subr.mxu0 0.0
      %1149 = vmatpush1.msra.mxu0 0.0
      %1150 = vmatprep.mubr.f32.mxu0 0.0
      %1151 = vmatmul.mubr.f32.gmra.mrb[0].mxu0 %v1084
      %v1152 = vpop.f32.mrb[0].mxu0
      %v1153 = vadd.f32 0.0, %v1152
      %v1154 = vpop.f32.mrb[0].mxu0
      %1155 = vdwg.mxu0
      %1157 = vrot.lane.b32.xlu0 %v1153, 120
      %v1158 = vpop.permute.xlu0 %1157
      %1159 = vrot.lane.b32.xlu0 %v1153, 112
      %v1160 = vpop.permute.xlu0 %1159
      %1161 = vrot.lane.b32.xlu0 %v1153, 104
      %v1162 = vpop.permute.xlu0 %1161
      %1163 = vrot.lane.b32.xlu0 %v1153, 96
      %v1164 = vpop.permute.xlu0 %1163
      %vm1165 = vcmask 64512
      %v1166 = vsel %vm1165, %v1153, 0
      %v1168 = vsel %vm1165, %v1164, 0
      %1170 = vmatprep.subr.mxu0 0.0
      %1171 = vmatpush1.xpose.msra.mxu0 %v1168
      %1172 = vmatprep.subr.mxu0 0.0
      %1173 = vmatpush1.xpose.msra.mxu0 0.0
      %1174 = vmatprep.subr.mxu0 0.0
      %1175 = vmatpush1.xpose.msra.mxu0 0.0
      %1176 = vmatprep.subr.mxu0 0.0
      %1177 = vmatpush1.xpose.msra.mxu0 0.0
      %1178 = vmatprep.subr.mxu0 0.0
      %1179 = vmatpush1.xpose.msra.mxu0 0.0
      %1180 = vmatprep.subr.mxu0 0.0
      %1181 = vmatpush1.xpose.msra.mxu0 0.0
      %1182 = vmatprep.subr.mxu0 0.0
      %1183 = vmatpush1.xpose.msra.mxu0 0.0
      %1184 = vmatprep.subr.mxu0 0.0
      %1185 = vmatpush1.xpose.msra.mxu0 0.0
      %1186 = vmatprep.subr.mxu0 0.0
      %1187 = vmatpush1.xpose.msra.mxu0 0.0
      %1188 = vmatprep.subr.mxu0 0.0
      %1189 = vmatpush1.xpose.msra.mxu0 0.0
      %1190 = vmatprep.subr.mxu0 0.0
      %1191 = vmatpush1.xpose.msra.mxu0 0.0
      %1192 = vmatprep.subr.mxu0 0.0
      %1193 = vmatpush1.xpose.msra.mxu0 0.0
      %1194 = vmatprep.subr.mxu0 0.0
      %1195 = vmatpush1.xpose.msra.mxu0 0.0
      %1196 = vmatprep.subr.mxu0 0.0
      %1197 = vmatpush1.xpose.msra.mxu0 0.0
      %1198 = vmatprep.subr.mxu0 0.0
      %1199 = vmatpush1.xpose.msra.mxu0 0.0
      %1200 = vmatprep.subr.mxu0 0.0
      %1201 = vmatpush1.xpose.msra.mxu0 0.0
      %1202 = vmatprep.subr.mxu0 0.0
      %1203 = vmatpush1.xpose.msra.mxu0 0.0
      %1204 = vmatprep.subr.mxu0 0.0
      %1205 = vmatpush1.xpose.msra.mxu0 0.0
      %1206 = vmatprep.subr.mxu0 0.0
      %1207 = vmatpush1.xpose.msra.mxu0 0.0
      %1208 = vmatprep.subr.mxu0 0.0
      %1209 = vmatpush1.xpose.msra.mxu0 0.0
      %1210 = vmatprep.subr.mxu0 0.0
      %1211 = vmatpush1.xpose.msra.mxu0 0.0
      %1212 = vmatprep.subr.mxu0 0.0
      %1213 = vmatpush1.xpose.msra.mxu0 0.0
      %1214 = vmatprep.subr.mxu0 0.0
      %1215 = vmatpush1.xpose.msra.mxu0 0.0
      %1216 = vmatprep.subr.mxu0 0.0
      %1217 = vmatpush1.xpose.msra.mxu0 0.0
      %1218 = vmatprep.subr.mxu0 0.0
      %1219 = vmatpush1.xpose.msra.mxu0 0.0
      %1220 = vmatprep.subr.mxu0 0.0
      %1221 = vmatpush1.xpose.msra.mxu0 0.0
      %1222 = vmatprep.subr.mxu0 0.0
      %1223 = vmatpush1.xpose.msra.mxu0 0.0
      %1224 = vmatprep.subr.mxu0 0.0
      %1225 = vmatpush1.xpose.msra.mxu0 0.0
      %1226 = vmatprep.subr.mxu0 0.0
      %1227 = vmatpush1.xpose.msra.mxu0 0.0
      %1228 = vmatprep.subr.mxu0 0.0
      %1229 = vmatpush1.xpose.msra.mxu0 0.0
      %1230 = vmatprep.subr.mxu0 0.0
      %1231 = vmatpush1.xpose.msra.mxu0 0.0
      %1232 = vmatprep.subr.mxu0 0.0
      %1233 = vmatpush1.xpose.msra.mxu0 0.0
      %1234 = vmatprep.mubr.f32.mxu0 0.0
      %1235 = vmatmul.mubr.f32.gmra.mrb[0].mxu0 %v1166
      %v1236 = vpop.f32.mrb[0].mxu0
      %v1237 = vadd.f32 0.0, %v1236
      %v1238 = vpop.f32.mrb[0].mxu0
      %1239 = vdwg.mxu0
      %1240 = vrot.lane.b32.xlu0 %v1158, 96
      %v1241 = vpop.permute.xlu0 %1240
      %v1242 = vsel %vm1165, %v1158, 0
      %v1244 = vsel %vm1165, %v1241, 0
      %1246 = vmatprep.subr.mxu0 0.0
      %1247 = vmatpush1.xpose.msra.mxu0 %v1244
      %1248 = vmatprep.subr.mxu0 0.0
      %1249 = vmatpush1.xpose.msra.mxu0 0.0
      %1250 = vmatprep.subr.mxu0 0.0
      %1251 = vmatpush1.xpose.msra.mxu0 0.0
      %1252 = vmatprep.subr.mxu0 0.0
      %1253 = vmatpush1.xpose.msra.mxu0 0.0
      %1254 = vmatprep.subr.mxu0 0.0
      %1255 = vmatpush1.xpose.msra.mxu0 0.0
      %1256 = vmatprep.subr.mxu0 0.0
      %1257 = vmatpush1.xpose.msra.mxu0 0.0
      %1258 = vmatprep.subr.mxu0 0.0
      %1259 = vmatpush1.xpose.msra.mxu0 0.0
      %1260 = vmatprep.subr.mxu0 0.0
      %1261 = vmatpush1.xpose.msra.mxu0 0.0
      %1262 = vmatprep.subr.mxu0 0.0
      %1263 = vmatpush1.xpose.msra.mxu0 0.0
      %1264 = vmatprep.subr.mxu0 0.0
      %1265 = vmatpush1.xpose.msra.mxu0 0.0
      %1266 = vmatprep.subr.mxu0 0.0
      %1267 = vmatpush1.xpose.msra.mxu0 0.0
      %1268 = vmatprep.subr.mxu0 0.0
      %1269 = vmatpush1.xpose.msra.mxu0 0.0
      %1270 = vmatprep.subr.mxu0 0.0
      %1271 = vmatpush1.xpose.msra.mxu0 0.0
      %1272 = vmatprep.subr.mxu0 0.0
      %1273 = vmatpush1.xpose.msra.mxu0 0.0
      %1274 = vmatprep.subr.mxu0 0.0
      %1275 = vmatpush1.xpose.msra.mxu0 0.0
      %1276 = vmatprep.subr.mxu0 0.0
      %1277 = vmatpush1.xpose.msra.mxu0 0.0
      %1278 = vmatprep.subr.mxu0 0.0
      %1279 = vmatpush1.xpose.msra.mxu0 0.0
      %1280 = vmatprep.subr.mxu0 0.0
      %1281 = vmatpush1.xpose.msra.mxu0 0.0
      %1282 = vmatprep.subr.mxu0 0.0
      %1283 = vmatpush1.xpose.msra.mxu0 0.0
      %1284 = vmatprep.subr.mxu0 0.0
      %1285 = vmatpush1.xpose.msra.mxu0 0.0
      %1286 = vmatprep.subr.mxu0 0.0
      %1287 = vmatpush1.xpose.msra.mxu0 0.0
      %1288 = vmatprep.subr.mxu0 0.0
      %1289 = vmatpush1.xpose.msra.mxu0 0.0
      %1290 = vmatprep.subr.mxu0 0.0
      %1291 = vmatpush1.xpose.msra.mxu0 0.0
      %1292 = vmatprep.subr.mxu0 0.0
      %1293 = vmatpush1.xpose.msra.mxu0 0.0
      %1294 = vmatprep.subr.mxu0 0.0
      %1295 = vmatpush1.xpose.msra.mxu0 0.0
      %1296 = vmatprep.subr.mxu0 0.0
      %1297 = vmatpush1.xpose.msra.mxu0 0.0
      %1298 = vmatprep.subr.mxu0 0.0
      %1299 = vmatpush1.xpose.msra.mxu0 0.0
      %1300 = vmatprep.subr.mxu0 0.0
      %1301 = vmatpush1.xpose.msra.mxu0 0.0
      %1302 = vmatprep.subr.mxu0 0.0
      %1303 = vmatpush1.xpose.msra.mxu0 0.0
      %1304 = vmatprep.subr.mxu0 0.0
      %1305 = vmatpush1.xpose.msra.mxu0 0.0
      %1306 = vmatprep.subr.mxu0 0.0
      %1307 = vmatpush1.xpose.msra.mxu0 0.0
      %1308 = vmatprep.subr.mxu0 0.0
      %1309 = vmatpush1.xpose.msra.mxu0 0.0
      %1310 = vmatprep.mubr.f32.mxu0 0.0
      %1311 = vmatmul.mubr.f32.gmra.mrb[0].mxu0 %v1242
      %v1312 = vpop.f32.mrb[0].mxu0
      %v1313 = vadd.f32 0.0, %v1312
      %v1314 = vpop.f32.mrb[0].mxu0
      %1315 = vdwg.mxu0
      %1316 = vrot.lane.b32.xlu0 %v1160, 96
      %v1317 = vpop.permute.xlu0 %1316
      %v1318 = vsel %vm1165, %v1160, 0
      %v1320 = vsel %vm1165, %v1317, 0
      %1322 = vmatprep.subr.mxu0 0.0
      %1323 = vmatpush1.xpose.msra.mxu0 %v1320
      %1324 = vmatprep.subr.mxu0 0.0
      %1325 = vmatpush1.xpose.msra.mxu0 0.0
      %1326 = vmatprep.subr.mxu0 0.0
      %1327 = vmatpush1.xpose.msra.mxu0 0.0
      %1328 = vmatprep.subr.mxu0 0.0
      %1329 = vmatpush1.xpose.msra.mxu0 0.0
      %1330 = vmatprep.subr.mxu0 0.0
      %1331 = vmatpush1.xpose.msra.mxu0 0.0
      %1332 = vmatprep.subr.mxu0 0.0
      %1333 = vmatpush1.xpose.msra.mxu0 0.0
      %1334 = vmatprep.subr.mxu0 0.0
      %1335 = vmatpush1.xpose.msra.mxu0 0.0
      %1336 = vmatprep.subr.mxu0 0.0
      %1337 = vmatpush1.xpose.msra.mxu0 0.0
      %1338 = vmatprep.subr.mxu0 0.0
      %1339 = vmatpush1.xpose.msra.mxu0 0.0
      %1340 = vmatprep.subr.mxu0 0.0
      %1341 = vmatpush1.xpose.msra.mxu0 0.0
      %1342 = vmatprep.subr.mxu0 0.0
      %1343 = vmatpush1.xpose.msra.mxu0 0.0
      %1344 = vmatprep.subr.mxu0 0.0
      %1345 = vmatpush1.xpose.msra.mxu0 0.0
      %1346 = vmatprep.subr.mxu0 0.0
      %1347 = vmatpush1.xpose.msra.mxu0 0.0
      %1348 = vmatprep.subr.mxu0 0.0
      %1349 = vmatpush1.xpose.msra.mxu0 0.0
      %1350 = vmatprep.subr.mxu0 0.0
      %1351 = vmatpush1.xpose.msra.mxu0 0.0
      %1352 = vmatprep.subr.mxu0 0.0
      %1353 = vmatpush1.xpose.msra.mxu0 0.0
      %1354 = vmatprep.subr.mxu0 0.0
      %1355 = vmatpush1.xpose.msra.mxu0 0.0
      %1356 = vmatprep.subr.mxu0 0.0
      %1357 = vmatpush1.xpose.msra.mxu0 0.0
      %1358 = vmatprep.subr.mxu0 0.0
      %1359 = vmatpush1.xpose.msra.mxu0 0.0
      %1360 = vmatprep.subr.mxu0 0.0
      %1361 = vmatpush1.xpose.msra.mxu0 0.0
      %1362 = vmatprep.subr.mxu0 0.0
      %1363 = vmatpush1.xpose.msra.mxu0 0.0
      %1364 = vmatprep.subr.mxu0 0.0
      %1365 = vmatpush1.xpose.msra.mxu0 0.0
      %1366 = vmatprep.subr.mxu0 0.0
      %1367 = vmatpush1.xpose.msra.mxu0 0.0
      %1368 = vmatprep.subr.mxu0 0.0
      %1369 = vmatpush1.xpose.msra.mxu0 0.0
      %1370 = vmatprep.subr.mxu0 0.0
      %1371 = vmatpush1.xpose.msra.mxu0 0.0
      %1372 = vmatprep.subr.mxu0 0.0
      %1373 = vmatpush1.xpose.msra.mxu0 0.0
      %1374 = vmatprep.subr.mxu0 0.0
      %1375 = vmatpush1.xpose.msra.mxu0 0.0
      %1376 = vmatprep.subr.mxu0 0.0
      %1377 = vmatpush1.xpose.msra.mxu0 0.0
      %1378 = vmatprep.subr.mxu0 0.0
      %1379 = vmatpush1.xpose.msra.mxu0 0.0
      %1380 = vmatprep.subr.mxu0 0.0
      %1381 = vmatpush1.xpose.msra.mxu0 0.0
      %1382 = vmatprep.subr.mxu0 0.0
      %1383 = vmatpush1.xpose.msra.mxu0 0.0
      %1384 = vmatprep.subr.mxu0 0.0
      %1385 = vmatpush1.xpose.msra.mxu0 0.0
      %1386 = vmatprep.mubr.f32.mxu0 0.0
      %1387 = vmatmul.mubr.f32.gmra.mrb[0].mxu0 %v1318
      %v1388 = vpop.f32.mrb[0].mxu0
      %v1389 = vadd.f32 0.0, %v1388
      %v1390 = vpop.f32.mrb[0].mxu0
      %1391 = vdwg.mxu0
      %1392 = vrot.lane.b32.xlu0 %v1162, 96
      %v1393 = vpop.permute.xlu0 %1392
      %v1394 = vsel %vm1165, %v1162, 0
      %v1396 = vsel %vm1165, %v1393, 0
      %1398 = vmatprep.subr.mxu0 0.0
      %1399 = vmatpush1.xpose.msra.mxu0 %v1396
      %1400 = vmatprep.subr.mxu0 0.0
      %1401 = vmatpush1.xpose.msra.mxu0 0.0
      %1402 = vmatprep.subr.mxu0 0.0
      %1403 = vmatpush1.xpose.msra.mxu0 0.0
      %1404 = vmatprep.subr.mxu0 0.0
      %1405 = vmatpush1.xpose.msra.mxu0 0.0
      %1406 = vmatprep.subr.mxu0 0.0
      %1407 = vmatpush1.xpose.msra.mxu0 0.0
      %1408 = vmatprep.subr.mxu0 0.0
      %1409 = vmatpush1.xpose.msra.mxu0 0.0
      %1410 = vmatprep.subr.mxu0 0.0
      %1411 = vmatpush1.xpose.msra.mxu0 0.0
      %1412 = vmatprep.subr.mxu0 0.0
      %1413 = vmatpush1.xpose.msra.mxu0 0.0
      %1414 = vmatprep.subr.mxu0 0.0
      %1415 = vmatpush1.xpose.msra.mxu0 0.0
      %1416 = vmatprep.subr.mxu0 0.0
      %1417 = vmatpush1.xpose.msra.mxu0 0.0
      %1418 = vmatprep.subr.mxu0 0.0
      %1419 = vmatpush1.xpose.msra.mxu0 0.0
      %1420 = vmatprep.subr.mxu0 0.0
      %1421 = vmatpush1.xpose.msra.mxu0 0.0
      %1422 = vmatprep.subr.mxu0 0.0
      %1423 = vmatpush1.xpose.msra.mxu0 0.0
      %1424 = vmatprep.subr.mxu0 0.0
      %1425 = vmatpush1.xpose.msra.mxu0 0.0
      %1426 = vmatprep.subr.mxu0 0.0
      %1427 = vmatpush1.xpose.msra.mxu0 0.0
      %1428 = vmatprep.subr.mxu0 0.0
      %1429 = vmatpush1.xpose.msra.mxu0 0.0
      %1430 = vmatprep.subr.mxu0 0.0
      %1431 = vmatpush1.xpose.msra.mxu0 0.0
      %1432 = vmatprep.subr.mxu0 0.0
      %1433 = vmatpush1.xpose.msra.mxu0 0.0
      %1434 = vmatprep.subr.mxu0 0.0
      %1435 = vmatpush1.xpose.msra.mxu0 0.0
      %1436 = vmatprep.subr.mxu0 0.0
      %1437 = vmatpush1.xpose.msra.mxu0 0.0
      %1438 = vmatprep.subr.mxu0 0.0
      %1439 = vmatpush1.xpose.msra.mxu0 0.0
      %1440 = vmatprep.subr.mxu0 0.0
      %1441 = vmatpush1.xpose.msra.mxu0 0.0
      %1442 = vmatprep.subr.mxu0 0.0
      %1443 = vmatpush1.xpose.msra.mxu0 0.0
      %1444 = vmatprep.subr.mxu0 0.0
      %1445 = vmatpush1.xpose.msra.mxu0 0.0
      %1446 = vmatprep.subr.mxu0 0.0
      %1447 = vmatpush1.xpose.msra.mxu0 0.0
      %1448 = vmatprep.subr.mxu0 0.0
      %1449 = vmatpush1.xpose.msra.mxu0 0.0
      %1450 = vmatprep.subr.mxu0 0.0
      %1451 = vmatpush1.xpose.msra.mxu0 0.0
      %1452 = vmatprep.subr.mxu0 0.0
      %1453 = vmatpush1.xpose.msra.mxu0 0.0
      %1454 = vmatprep.subr.mxu0 0.0
      %1455 = vmatpush1.xpose.msra.mxu0 0.0
      %1456 = vmatprep.subr.mxu0 0.0
      %1457 = vmatpush1.xpose.msra.mxu0 0.0
      %1458 = vmatprep.subr.mxu0 0.0
      %1459 = vmatpush1.xpose.msra.mxu0 0.0
      %1460 = vmatprep.subr.mxu0 0.0
      %1461 = vmatpush1.xpose.msra.mxu0 0.0
      %1462 = vmatprep.mubr.f32.mxu0 0.0
      %1463 = vmatmul.mubr.f32.gmra.mrb[0].mxu0 %v1394
      %v1464 = vpop.f32.mrb[0].mxu0
      %v1465 = vadd.f32 0.0, %v1464
      %v1466 = vpop.f32.mrb[0].mxu0
      %1467 = vdwg.mxu0
      %v1468 = vmul.f32 %v1237, 0.17677669
      %v1469 = vmul.f32 %v1313, 0.17677669
      %v1470 = vmul.f32 %v1389, 0.17677669
      %v1471 = vmul.f32 %v1465, 0.17677669
      %v1472 = vsel %vm1165, %v1468, -inf
      %1473 = vmax.xlane.f32.xlu0 %v1472
      %v1474 = vpop.xlane.xlu0 %1473
      %v1475 = vsel %vm1165, %v1469, -inf
      %1476 = vmax.xlane.f32.xlu0 %v1475
      %v1477 = vpop.xlane.xlu0 %1476
      %v1478 = vsel %vm1165, %v1470, -inf
      %1479 = vmax.xlane.f32.xlu0 %v1478
      %v1480 = vpop.xlane.xlu0 %1479
      %v1481 = vsel %vm1165, %v1471, -inf
      %1482 = vmax.xlane.f32.xlu0 %v1481
      %v1483 = vpop.xlane.xlu0 %1482
      %v1484 = vsub.f32 %v1468, %v1474
      %v1485 = vsub.f32 %v1469, %v1477
      %v1486 = vsub.f32 %v1470, %v1480
      %v1487 = vsub.f32 %v1471, %v1483
      %v1488 = vmul.f32 %v1484, 1.442695
      %v1489 = vpow.pop %v1488
      %v1490 = vmul.f32 %v1485, 1.442695
      %v1491 = vpow.pop %v1490
      %v1492 = vmul.f32 %v1486, 1.442695
      %v1493 = vpow.pop %v1492
      %v1494 = vmul.f32 %v1487, 1.442695
      %v1495 = vpow.pop %v1494
      %v1496 = vsel %vm1165, %v1489, 0.0
      %1497 = vadd.xlane.f32.xlu0 %v1496
      %v1498 = vpop.xlane.xlu0 %1497
      %v1499 = vsel %vm1165, %v1491, 0.0
      %1500 = vadd.xlane.f32.xlu0 %v1499
      %v1501 = vpop.xlane.xlu0 %1500
      %v1502 = vsel %vm1165, %v1493, 0.0
      %1503 = vadd.xlane.f32.xlu0 %v1502
      %v1504 = vpop.xlane.xlu0 %1503
      %v1505 = vsel %vm1165, %v1495, 0.0
      %1506 = vadd.xlane.f32.xlu0 %v1505
      %v1507 = vpop.xlane.xlu0 %1506
      %v1508 = vrcp.pop %v1498
      %v1509 = vrcp.pop %v1501
      %v1510 = vrcp.pop %v1504
      %v1511 = vrcp.pop %v1507
      %v1512 = vmul.f32 %v1489, %v1508
      %v1513 = vmul.f32 %v1491, %v1509
      %v1514 = vmul.f32 %v1493, %v1510
      %v1515 = vmul.f32 %v1495, %v1511
      %1516 = vrot.lane.b32.xlu0 %v1153, 64
      %v1517 = vpop.permute.xlu0 %1516
      %v1520 = vsel %vm1165, %v1512, 0
      %1522 = vmatprep.subr.mxu0 0.0
      %1523 = vmatpush1.msra.mxu0 %v1517
      %1524 = vmatprep.subr.mxu0 0.0
      %1525 = vmatpush1.msra.mxu0 0.0
      %1526 = vmatprep.subr.mxu0 0.0
      %1527 = vmatpush1.msra.mxu0 0.0
      %1528 = vmatprep.subr.mxu0 0.0
      %1529 = vmatpush1.msra.mxu0 0.0
      %1530 = vmatprep.subr.mxu0 0.0
      %1531 = vmatpush1.msra.mxu0 0.0
      %1532 = vmatprep.subr.mxu0 0.0
      %1533 = vmatpush1.msra.mxu0 0.0
      %1534 = vmatprep.subr.mxu0 0.0
      %1535 = vmatpush1.msra.mxu0 0.0
      %1536 = vmatprep.subr.mxu0 0.0
      %1537 = vmatpush1.msra.mxu0 0.0
      %1538 = vmatprep.subr.mxu0 0.0
      %1539 = vmatpush1.msra.mxu0 0.0
      %1540 = vmatprep.subr.mxu0 0.0
      %1541 = vmatpush1.msra.mxu0 0.0
      %1542 = vmatprep.subr.mxu0 0.0
      %1543 = vmatpush1.msra.mxu0 0.0
      %1544 = vmatprep.subr.mxu0 0.0
      %1545 = vmatpush1.msra.mxu0 0.0
      %1546 = vmatprep.subr.mxu0 0.0
      %1547 = vmatpush1.msra.mxu0 0.0
      %1548 = vmatprep.subr.mxu0 0.0
      %1549 = vmatpush1.msra.mxu0 0.0
      %1550 = vmatprep.subr.mxu0 0.0
      %1551 = vmatpush1.msra.mxu0 0.0
      %1552 = vmatprep.subr.mxu0 0.0
      %1553 = vmatpush1.msra.mxu0 0.0
      %1554 = vmatprep.subr.mxu0 0.0
      %1555 = vmatpush1.msra.mxu0 0.0
      %1556 = vmatprep.subr.mxu0 0.0
      %1557 = vmatpush1.msra.mxu0 0.0
      %1558 = vmatprep.subr.mxu0 0.0
      %1559 = vmatpush1.msra.mxu0 0.0
      %1560 = vmatprep.subr.mxu0 0.0
      %1561 = vmatpush1.msra.mxu0 0.0
      %1562 = vmatprep.subr.mxu0 0.0
      %1563 = vmatpush1.msra.mxu0 0.0
      %1564 = vmatprep.subr.mxu0 0.0
      %1565 = vmatpush1.msra.mxu0 0.0
      %1566 = vmatprep.subr.mxu0 0.0
      %1567 = vmatpush1.msra.mxu0 0.0
      %1568 = vmatprep.subr.mxu0 0.0
      %1569 = vmatpush1.msra.mxu0 0.0
      %1570 = vmatprep.subr.mxu0 0.0
      %1571 = vmatpush1.msra.mxu0 0.0
      %1572 = vmatprep.subr.mxu0 0.0
      %1573 = vmatpush1.msra.mxu0 0.0
      %1574 = vmatprep.subr.mxu0 0.0
      %1575 = vmatpush1.msra.mxu0 0.0
      %1576 = vmatprep.subr.mxu0 0.0
      %1577 = vmatpush1.msra.mxu0 0.0
      %1578 = vmatprep.subr.mxu0 0.0
      %1579 = vmatpush1.msra.mxu0 0.0
      %1580 = vmatprep.subr.mxu0 0.0
      %1581 = vmatpush1.msra.mxu0 0.0
      %1582 = vmatprep.subr.mxu0 0.0
      %1583 = vmatpush1.msra.mxu0 0.0
      %1584 = vmatprep.subr.mxu0 0.0
      %1585 = vmatpush1.msra.mxu0 0.0
      %1586 = vmatprep.mubr.f32.mxu0 0.0
      %1587 = vmatmul.mubr.f32.gmra.mrb[0].mxu0 %v1520
      %v1588 = vpop.f32.mrb[0].mxu0
      %v1589 = vadd.f32 0.0, %v1588
      %v1590 = vpop.f32.mrb[0].mxu0
      %1591 = vdwg.mxu0
      %1592 = vrot.lane.b32.xlu0 %v1158, 64
      %v1593 = vpop.permute.xlu0 %1592
      %v1596 = vsel %vm1165, %v1513, 0
      %1598 = vmatprep.subr.mxu0 0.0
      %1599 = vmatpush1.msra.mxu0 %v1593
      %1600 = vmatprep.subr.mxu0 0.0
      %1601 = vmatpush1.msra.mxu0 0.0
      %1602 = vmatprep.subr.mxu0 0.0
      %1603 = vmatpush1.msra.mxu0 0.0
      %1604 = vmatprep.subr.mxu0 0.0
      %1605 = vmatpush1.msra.mxu0 0.0
      %1606 = vmatprep.subr.mxu0 0.0
      %1607 = vmatpush1.msra.mxu0 0.0
      %1608 = vmatprep.subr.mxu0 0.0
      %1609 = vmatpush1.msra.mxu0 0.0
      %1610 = vmatprep.subr.mxu0 0.0
      %1611 = vmatpush1.msra.mxu0 0.0
      %1612 = vmatprep.subr.mxu0 0.0
      %1613 = vmatpush1.msra.mxu0 0.0
      %1614 = vmatprep.subr.mxu0 0.0
      %1615 = vmatpush1.msra.mxu0 0.0
      %1616 = vmatprep.subr.mxu0 0.0
      %1617 = vmatpush1.msra.mxu0 0.0
      %1618 = vmatprep.subr.mxu0 0.0
      %1619 = vmatpush1.msra.mxu0 0.0
      %1620 = vmatprep.subr.mxu0 0.0
      %1621 = vmatpush1.msra.mxu0 0.0
      %1622 = vmatprep.subr.mxu0 0.0
      %1623 = vmatpush1.msra.mxu0 0.0
      %1624 = vmatprep.subr.mxu0 0.0
      %1625 = vmatpush1.msra.mxu0 0.0
      %1626 = vmatprep.subr.mxu0 0.0
      %1627 = vmatpush1.msra.mxu0 0.0
      %1628 = vmatprep.subr.mxu0 0.0
      %1629 = vmatpush1.msra.mxu0 0.0
      %1630 = vmatprep.subr.mxu0 0.0
      %1631 = vmatpush1.msra.mxu0 0.0
      %1632 = vmatprep.subr.mxu0 0.0
      %1633 = vmatpush1.msra.mxu0 0.0
      %1634 = vmatprep.subr.mxu0 0.0
      %1635 = vmatpush1.msra.mxu0 0.0
      %1636 = vmatprep.subr.mxu0 0.0
      %1637 = vmatpush1.msra.mxu0 0.0
      %1638 = vmatprep.subr.mxu0 0.0
      %1639 = vmatpush1.msra.mxu0 0.0
      %1640 = vmatprep.subr.mxu0 0.0
      %1641 = vmatpush1.msra.mxu0 0.0
      %1642 = vmatprep.subr.mxu0 0.0
      %1643 = vmatpush1.msra.mxu0 0.0
      %1644 = vmatprep.subr.mxu0 0.0
      %1645 = vmatpush1.msra.mxu0 0.0
      %1646 = vmatprep.subr.mxu0 0.0
      %1647 = vmatpush1.msra.mxu0 0.0
      %1648 = vmatprep.subr.mxu0 0.0
      %1649 = vmatpush1.msra.mxu0 0.0
      %1650 = vmatprep.subr.mxu0 0.0
      %1651 = vmatpush1.msra.mxu0 0.0
      %1652 = vmatprep.subr.mxu0 0.0
      %1653 = vmatpush1.msra.mxu0 0.0
      %1654 = vmatprep.subr.mxu0 0.0
      %1655 = vmatpush1.msra.mxu0 0.0
      %1656 = vmatprep.subr.mxu0 0.0
      %1657 = vmatpush1.msra.mxu0 0.0
      %1658 = vmatprep.subr.mxu0 0.0
      %1659 = vmatpush1.msra.mxu0 0.0
      %1660 = vmatprep.subr.mxu0 0.0
      %1661 = vmatpush1.msra.mxu0 0.0
      %1662 = vmatprep.mubr.f32.mxu0 0.0
      %1663 = vmatmul.mubr.f32.gmra.mrb[0].mxu0 %v1596
      %v1664 = vpop.f32.mrb[0].mxu0
      %v1665 = vadd.f32 0.0, %v1664
      %v1666 = vpop.f32.mrb[0].mxu0
      %1667 = vdwg.mxu0
      %1668 = vrot.lane.b32.xlu0 %v1160, 64
      %v1669 = vpop.permute.xlu0 %1668
      %v1672 = vsel %vm1165, %v1514, 0
      %1674 = vmatprep.subr.mxu0 0.0
      %1675 = vmatpush1.msra.mxu0 %v1669
      %1676 = vmatprep.subr.mxu0 0.0
      %1677 = vmatpush1.msra.mxu0 0.0
      %1678 = vmatprep.subr.mxu0 0.0
      %1679 = vmatpush1.msra.mxu0 0.0
      %1680 = vmatprep.subr.mxu0 0.0
      %1681 = vmatpush1.msra.mxu0 0.0
      %1682 = vmatprep.subr.mxu0 0.0
      %1683 = vmatpush1.msra.mxu0 0.0
      %1684 = vmatprep.subr.mxu0 0.0
      %1685 = vmatpush1.msra.mxu0 0.0
      %1686 = vmatprep.subr.mxu0 0.0
      %1687 = vmatpush1.msra.mxu0 0.0
      %1688 = vmatprep.subr.mxu0 0.0
      %1689 = vmatpush1.msra.mxu0 0.0
      %1690 = vmatprep.subr.mxu0 0.0
      %1691 = vmatpush1.msra.mxu0 0.0
      %1692 = vmatprep.subr.mxu0 0.0
      %1693 = vmatpush1.msra.mxu0 0.0
      %1694 = vmatprep.subr.mxu0 0.0
      %1695 = vmatpush1.msra.mxu0 0.0
      %1696 = vmatprep.subr.mxu0 0.0
      %1697 = vmatpush1.msra.mxu0 0.0
      %1698 = vmatprep.subr.mxu0 0.0
      %1699 = vmatpush1.msra.mxu0 0.0
      %1700 = vmatprep.subr.mxu0 0.0
      %1701 = vmatpush1.msra.mxu0 0.0
      %1702 = vmatprep.subr.mxu0 0.0
      %1703 = vmatpush1.msra.mxu0 0.0
      %1704 = vmatprep.subr.mxu0 0.0
      %1705 = vmatpush1.msra.mxu0 0.0
      %1706 = vmatprep.subr.mxu0 0.0
      %1707 = vmatpush1.msra.mxu0 0.0
      %1708 = vmatprep.subr.mxu0 0.0
      %1709 = vmatpush1.msra.mxu0 0.0
      %1710 = vmatprep.subr.mxu0 0.0
      %1711 = vmatpush1.msra.mxu0 0.0
      %1712 = vmatprep.subr.mxu0 0.0
      %1713 = vmatpush1.msra.mxu0 0.0
      %1714 = vmatprep.subr.mxu0 0.0
      %1715 = vmatpush1.msra.mxu0 0.0
      %1716 = vmatprep.subr.mxu0 0.0
      %1717 = vmatpush1.msra.mxu0 0.0
      %1718 = vmatprep.subr.mxu0 0.0
      %1719 = vmatpush1.msra.mxu0 0.0
      %1720 = vmatprep.subr.mxu0 0.0
      %1721 = vmatpush1.msra.mxu0 0.0
      %1722 = vmatprep.subr.mxu0 0.0
      %1723 = vmatpush1.msra.mxu0 0.0
      %1724 = vmatprep.subr.mxu0 0.0
      %1725 = vmatpush1.msra.mxu0 0.0
      %1726 = vmatprep.subr.mxu0 0.0
      %1727 = vmatpush1.msra.mxu0 0.0
      %1728 = vmatprep.subr.mxu0 0.0
      %1729 = vmatpush1.msra.mxu0 0.0
      %1730 = vmatprep.subr.mxu0 0.0
      %1731 = vmatpush1.msra.mxu0 0.0
      %1732 = vmatprep.subr.mxu0 0.0
      %1733 = vmatpush1.msra.mxu0 0.0
      %1734 = vmatprep.subr.mxu0 0.0
      %1735 = vmatpush1.msra.mxu0 0.0
      %1736 = vmatprep.subr.mxu0 0.0
      %1737 = vmatpush1.msra.mxu0 0.0
      %1738 = vmatprep.mubr.f32.mxu0 0.0
      %1739 = vmatmul.mubr.f32.gmra.mrb[0].mxu0 %v1672
      %v1740 = vpop.f32.mrb[0].mxu0
      %v1741 = vadd.f32 0.0, %v1740
      %v1742 = vpop.f32.mrb[0].mxu0
      %1743 = vdwg.mxu0
      %1744 = vrot.lane.b32.xlu0 %v1162, 64
      %v1745 = vpop.permute.xlu0 %1744
      %v1748 = vsel %vm1165, %v1515, 0
      %1750 = vmatprep.subr.mxu0 0.0
      %1751 = vmatpush1.msra.mxu0 %v1745
      %1752 = vmatprep.subr.mxu0 0.0
      %1753 = vmatpush1.msra.mxu0 0.0
      %1754 = vmatprep.subr.mxu0 0.0
      %1755 = vmatpush1.msra.mxu0 0.0
      %1756 = vmatprep.subr.mxu0 0.0
      %1757 = vmatpush1.msra.mxu0 0.0
      %1758 = vmatprep.subr.mxu0 0.0
      %1759 = vmatpush1.msra.mxu0 0.0
      %1760 = vmatprep.subr.mxu0 0.0
      %1761 = vmatpush1.msra.mxu0 0.0
      %1762 = vmatprep.subr.mxu0 0.0
      %1763 = vmatpush1.msra.mxu0 0.0
      %1764 = vmatprep.subr.mxu0 0.0
      %1765 = vmatpush1.msra.mxu0 0.0
      %1766 = vmatprep.subr.mxu0 0.0
      %1767 = vmatpush1.msra.mxu0 0.0
      %1768 = vmatprep.subr.mxu0 0.0
      %1769 = vmatpush1.msra.mxu0 0.0
      %1770 = vmatprep.subr.mxu0 0.0
      %1771 = vmatpush1.msra.mxu0 0.0
      %1772 = vmatprep.subr.mxu0 0.0
      %1773 = vmatpush1.msra.mxu0 0.0
      %1774 = vmatprep.subr.mxu0 0.0
      %1775 = vmatpush1.msra.mxu0 0.0
      %1776 = vmatprep.subr.mxu0 0.0
      %1777 = vmatpush1.msra.mxu0 0.0
      %1778 = vmatprep.subr.mxu0 0.0
      %1779 = vmatpush1.msra.mxu0 0.0
      %1780 = vmatprep.subr.mxu0 0.0
      %1781 = vmatpush1.msra.mxu0 0.0
      %1782 = vmatprep.subr.mxu0 0.0
      %1783 = vmatpush1.msra.mxu0 0.0
      %1784 = vmatprep.subr.mxu0 0.0
      %1785 = vmatpush1.msra.mxu0 0.0
      %1786 = vmatprep.subr.mxu0 0.0
      %1787 = vmatpush1.msra.mxu0 0.0
      %1788 = vmatprep.subr.mxu0 0.0
      %1789 = vmatpush1.msra.mxu0 0.0
      %1790 = vmatprep.subr.mxu0 0.0
      %1791 = vmatpush1.msra.mxu0 0.0
      %1792 = vmatprep.subr.mxu0 0.0
      %1793 = vmatpush1.msra.mxu0 0.0
      %1794 = vmatprep.subr.mxu0 0.0
      %1795 = vmatpush1.msra.mxu0 0.0
      %1796 = vmatprep.subr.mxu0 0.0
      %1797 = vmatpush1.msra.mxu0 0.0
      %1798 = vmatprep.subr.mxu0 0.0
      %1799 = vmatpush1.msra.mxu0 0.0
      %1800 = vmatprep.subr.mxu0 0.0
      %1801 = vmatpush1.msra.mxu0 0.0
      %1802 = vmatprep.subr.mxu0 0.0
      %1803 = vmatpush1.msra.mxu0 0.0
      %1804 = vmatprep.subr.mxu0 0.0
      %1805 = vmatpush1.msra.mxu0 0.0
      %1806 = vmatprep.subr.mxu0 0.0
      %1807 = vmatpush1.msra.mxu0 0.0
      %1808 = vmatprep.subr.mxu0 0.0
      %1809 = vmatpush1.msra.mxu0 0.0
      %1810 = vmatprep.subr.mxu0 0.0
      %1811 = vmatpush1.msra.mxu0 0.0
      %1812 = vmatprep.subr.mxu0 0.0
      %1813 = vmatpush1.msra.mxu0 0.0
      %1814 = vmatprep.mubr.f32.mxu0 0.0
      %1815 = vmatmul.mubr.f32.gmra.mrb[0].mxu0 %v1748
      %v1816 = vpop.f32.mrb[0].mxu0
      %v1817 = vadd.f32 0.0, %v1816
      %v1818 = vpop.f32.mrb[0].mxu0
      %1819 = vdwg.mxu0
      %1821 = vrot.lane.b32.xlu0 %v1665, 8
      %v1822 = vpop.permute.xlu0 %1821
      %1825 = vrot.lane.b32.xlu0 %v1741, 16
      %v1826 = vpop.permute.xlu0 %1825
      %1829 = vrot.lane.b32.xlu0 %v1817, 24
      %v1830 = vpop.permute.xlu0 %1829
      %v1832 = vsel %vm1165, %v1589, %v1822
      %v1833 = vsel %vm629, %v1832, %v1826
      %vm1834 = vcmask 195584
      %v1835 = vsel %vm1834, %v1833, %v1830
      %v1836 = vld [vmem:[%s10] sm:$0xff]
      %v1837 = vld [vmem:[%s10 + $0x8] sm:$0xff]
      %v1838 = vld [vmem:[%s10 + $0x10] sm:$0xff]
      %v1839 = vld [vmem:[%s10 + $0x18] sm:$0xff]
      %v1841 = vsel %vm492, %v1835, 0
      %1843 = vmatprep.subr.mxu0 0.0
      %1844 = vmatpush1.msra.mxu0 %v1836
      %1845 = vmatprep.subr.mxu0 0.0
      %1846 = vmatpush1.msra.mxu0 %v1837
      %1847 = vmatprep.subr.mxu0 0.0
      %1848 = vmatpush1.msra.mxu0 %v1838
      %1849 = vmatprep.subr.mxu0 0.0
      %1850 = vmatpush1.msra.mxu0 %v1839
      %1851 = vmatprep.subr.mxu0 0.0
      %1852 = vmatpush1.msra.mxu0 0.0
      %1853 = vmatprep.subr.mxu0 0.0
      %1854 = vmatpush1.msra.mxu0 0.0
      %1855 = vmatprep.subr.mxu0 0.0
      %1856 = vmatpush1.msra.mxu0 0.0
      %1857 = vmatprep.subr.mxu0 0.0
      %1858 = vmatpush1.msra.mxu0 0.0
      %1859 = vmatprep.subr.mxu0 0.0
      %1860 = vmatpush1.msra.mxu0 0.0
      %1861 = vmatprep.subr.mxu0 0.0
      %1862 = vmatpush1.msra.mxu0 0.0
      %1863 = vmatprep.subr.mxu0 0.0
      %1864 = vmatpush1.msra.mxu0 0.0
      %1865 = vmatprep.subr.mxu0 0.0
      %1866 = vmatpush1.msra.mxu0 0.0
      %1867 = vmatprep.subr.mxu0 0.0
      %1868 = vmatpush1.msra.mxu0 0.0
      %1869 = vmatprep.subr.mxu0 0.0
      %1870 = vmatpush1.msra.mxu0 0.0
      %1871 = vmatprep.subr.mxu0 0.0
      %1872 = vmatpush1.msra.mxu0 0.0
      %1873 = vmatprep.subr.mxu0 0.0
      %1874 = vmatpush1.msra.mxu0 0.0
      %1875 = vmatprep.subr.mxu0 0.0
      %1876 = vmatpush1.msra.mxu0 0.0
      %1877 = vmatprep.subr.mxu0 0.0
      %1878 = vmatpush1.msra.mxu0 0.0
      %1879 = vmatprep.subr.mxu0 0.0
      %1880 = vmatpush1.msra.mxu0 0.0
      %1881 = vmatprep.subr.mxu0 0.0
      %1882 = vmatpush1.msra.mxu0 0.0
      %1883 = vmatprep.subr.mxu0 0.0
      %1884 = vmatpush1.msra.mxu0 0.0
      %1885 = vmatprep.subr.mxu0 0.0
      %1886 = vmatpush1.msra.mxu0 0.0
      %1887 = vmatprep.subr.mxu0 0.0
      %1888 = vmatpush1.msra.mxu0 0.0
      %1889 = vmatprep.subr.mxu0 0.0
      %1890 = vmatpush1.msra.mxu0 0.0
      %1891 = vmatprep.subr.mxu0 0.0
      %1892 = vmatpush1.msra.mxu0 0.0
      %1893 = vmatprep.subr.mxu0 0.0
      %1894 = vmatpush1.msra.mxu0 0.0
      %1895 = vmatprep.subr.mxu0 0.0
      %1896 = vmatpush1.msra.mxu0 0.0
      %1897 = vmatprep.subr.mxu0 0.0
      %1898 = vmatpush1.msra.mxu0 0.0
      %1899 = vmatprep.subr.mxu0 0.0
      %1900 = vmatpush1.msra.mxu0 0.0
      %1901 = vmatprep.subr.mxu0 0.0
      %1902 = vmatpush1.msra.mxu0 0.0
      %1903 = vmatprep.subr.mxu0 0.0
      %1904 = vmatpush1.msra.mxu0 0.0
      %1905 = vmatprep.subr.mxu0 0.0
      %1906 = vmatpush1.msra.mxu0 0.0
      %1907 = vmatprep.mubr.f32.mxu0 0.0
      %1908 = vmatmul.mubr.f32.gmra.mrb[0].mxu0 %v1841
      %v1909 = vpop.f32.mrb[0].mxu0
      %v1910 = vadd.f32 0.0, %v1909
      %v1911 = vpop.f32.mrb[0].mxu0
      %1912 = vdwg.mxu0
      %v1914 = vcombine.high %v1910, %v1910
      %v1916 = vunpack.c.l.s4 1983009808
      %v1917 = vunpack.c.0.s8 %v1916
      %v1918 = vlaneseq
      %v1919 = vshrl.u32 %v1918, 7
      %v1920 = vsub.s32 %v1917, %v1919
      %v1921 = vrot.slane %v1910, %v1920
      %v1923 = vunpack.c.l.s4 1983009808
      %v1924 = vunpack.c.0.s8 %v1923
      %v1925 = vlaneseq
      %v1926 = vshrl.u32 %v1925, 7
      %v1927 = vsub.s32 %v1924, %v1926
      %v1928 = vrot.slane %v1914, %v1927
      %v1929 = vcombine.high %v1921, %v1921
      %v1930 = vcombine.high %v1928, %v1928
      %v1931 = vrot.slane %v1921, 1
      %v1932 = vrot.slane %v1929, 1
      %v1933 = vrot.slane %v1928, 1
      %v1934 = vrot.slane %v1930, 1
      %v1943 = vadd.f32 %v1018, %v1921
      %v1944 = vadd.f32 %v1019, %v1931
      %v1945 = vadd.f32 %v1020, %v1929
      %v1946 = vadd.f32 %v1021, %v1932
      %v1947 = vadd.f32 %v1022, %v1928
      %v1948 = vadd.f32 %v1023, %v1933
      %v1949 = vadd.f32 %v1024, %v1930
      %v1950 = vadd.f32 %v1025, %v1934
      %v1959 = vlaneseq
      %v1960 = vshrl.u32 %v1959, 7
      %v1961 = vsub.s32 0, %v1960
      %v1962 = vrot.slane %v1943, %v1961
      %v1963 = vlaneseq
      %v1964 = vshrl.u32 %v1963, 7
      %v1965 = vsub.s32 0, %v1964
      %v1966 = vrot.slane %v1944, %v1965
      %v1967 = vlaneseq
      %v1968 = vshrl.u32 %v1967, 7
      %v1969 = vsub.s32 0, %v1968
      %v1970 = vrot.slane %v1945, %v1969
      %v1971 = vlaneseq
      %v1972 = vshrl.u32 %v1971, 7
      %v1973 = vsub.s32 0, %v1972
      %v1974 = vrot.slane %v1946, %v1973
      %v1975 = vlaneseq
      %v1976 = vshrl.u32 %v1975, 7
      %v1977 = vsub.s32 0, %v1976
      %v1978 = vrot.slane %v1947, %v1977
      %v1979 = vlaneseq
      %v1980 = vshrl.u32 %v1979, 7
      %v1981 = vsub.s32 0, %v1980
      %v1982 = vrot.slane %v1948, %v1981
      %v1983 = vlaneseq
      %v1984 = vshrl.u32 %v1983, 7
      %v1985 = vsub.s32 0, %v1984
      %v1986 = vrot.slane %v1949, %v1985
      %v1987 = vlaneseq
      %v1988 = vshrl.u32 %v1987, 7
      %v1989 = vsub.s32 0, %v1988
      %v1990 = vrot.slane %v1950, %v1989
      %v1991 = vsel %vm1070, %v1966, %v1962
      %v1992 = vsel %vm1072, %v1970, %v1991
      %v1993 = vsel %vm1074, %v1974, %v1992
      %v1994 = vsel %vm1076, %v1978, %v1993
      %v1995 = vsel %vm1078, %v1982, %v1994
      %v1996 = vsel %vm1080, %v1986, %v1995
      %v1997 = vsel %vm1082, %v1990, %v1996
      %1999 = vxpose.xlu0.b32.start [1/16] %v1997, 128
      %2000 = vxpose.xlu0.b32.cont [2/16] 0.0, 128
      %2001 = vxpose.xlu0.b32.cont [3/16] 0.0, 128
      %2002 = vxpose.xlu0.b32.cont [4/16] 0.0, 128
      %2003 = vxpose.xlu0.b32.cont [5/16] 0.0, 128
      %2004 = vxpose.xlu0.b32.cont [6/16] 0.0, 128
      %2005 = vxpose.xlu0.b32.cont [7/16] 0.0, 128
      %2006 = vxpose.xlu0.b32.cont [8/16] 0.0, 128
      %2007 = vxpose.xlu0.b32.cont [9/16] 0.0, 128
      %2008 = vxpose.xlu0.b32.cont [10/16] 0.0, 128
      %2009 = vxpose.xlu0.b32.cont [11/16] 0.0, 128
      %2010 = vxpose.xlu0.b32.cont [12/16] 0.0, 128
      %2011 = vxpose.xlu0.b32.cont [13/16] 0.0, 128
      %2012 = vxpose.xlu0.b32.cont [14/16] 0.0, 128
      %2013 = vxpose.xlu0.b32.cont [15/16] 0.0, 128
      %2014 = vxpose.xlu0.b32.end [16/16] 0.0, 128
      %v2015 = vpop.trf.xlu0
      %v2016 = vpop.trf.xlu0
      %v2017 = vpop.trf.xlu0
      %v2018 = vpop.trf.xlu0
      %v2019 = vpop.trf.xlu0
      %v2020 = vpop.trf.xlu0
      %v2021 = vpop.trf.xlu0
      %v2022 = vpop.trf.xlu0
      %v2023 = vpop.trf.xlu0
      %v2024 = vpop.trf.xlu0
      %v2025 = vpop.trf.xlu0
      %v2026 = vpop.trf.xlu0
      %v2027 = vpop.trf.xlu0
      %v2028 = vpop.trf.xlu0
      %v2029 = vpop.trf.xlu0
      %v2030 = vpop.trf.xlu0
      %2031 = vst.msk [vmem:[%s386] sm:$0xff] %vm1165, %v2015
      %2032 = vst.msk [vmem:[%s386 + $0x8] sm:$0xff] %vm1165, %v2016
      %2033 = vst.msk [vmem:[%s386 + $0x10] sm:$0xff] %vm1165, %v2017
      %2034 = vst.msk [vmem:[%s386 + $0x18] sm:$0xff] %vm1165, %v2018
      %p2035 = scmp.lt.s32.totalorder %s22, 1
      %s2036 = scalar_select %p2035, %s22, 1
      %s2037 = smul.addr %s2036, 4
      %s2038 = smul.addr %s2037, 8
      %s2039 = scalar_lea.vmem %s11, %s2038
      // Predicated region
      $region65: #{tpu_custom_call.1} parent=63 // pred_check
        %p2040 = pneg %p276
      $region66: #{tpu_custom_call.1} parent=63 // pred_check_branch
        %2042 = sbr.rel (%p2040) target = $region68
      $region67: #{tpu_custom_call.1} parent=63 // pred_region
        _
      $region68: #{tpu_custom_call.1} parent=63 // pred_fallthru
        _
    $region64: #{tpu_custom_call.1} parent=5 // pred_fallthru
      _
    %p2043 = scmp.le.s32.totalorder 2, %s17
    // Predicated region
    $region69: #{tpu_custom_call.1} parent=5 // pred_check
      %p2044 = pneg %p2043
    $region70: #{tpu_custom_call.1} parent=5 // pred_check_branch
      %2046 = sbr.rel (%p2044) target = $region72
    $region71: #{tpu_custom_call.1} parent=5 // pred_region
      %s2047 = ssub.s32 %s17, 2
      // Predicated region
      $region73: #{tpu_custom_call.1} parent=71 // pred_check
        %p2048 = pneg %p282
      $region74: #{tpu_custom_call.1} parent=71 // pred_check_branch
        %2050 = sbr.rel (%p2048) target = $region76
      $region75: #{tpu_custom_call.1} parent=71 // pred_region
        %p2051 = scmp.lt.s32.totalorder %s23, 1
        %s2052 = scalar_select %p2051, %s23, 1
        %s2053 = smul.addr %s2052, 4
        %s2054 = smul.addr %s2053, 8
        %s2055 = scalar_lea.vmem %s11, %s2054
      $region76: #{tpu_custom_call.1} parent=71 // pred_fallthru
        _
    $region72: #{tpu_custom_call.1} parent=5 // pred_fallthru
      _
  $region6: #{tpu_custom_call.1} parent=0 // loop_footer
    %s21 = sadd.s32 1, %s17
  $region7: #{tpu_custom_call.1} parent=0 // loop_footer_branch
    %16 = sbr.rel target = $region3
  $region8: #{tpu_custom_call.1} parent=0 // loop_exit
    _

</llo_original>
